<compile_context>
chip_gen: v5e
topology: v5e:2x2
jax: 0.10.0
libtpu: 0.0.40
codegen_flags: <defaults>
</compile_context>

<pallas_src>
import jax
import jax.numpy as jnp
from jax.experimental import pallas as pl
from jax.experimental.pallas import tpu as pltpu

N_NODES = 16              # nodes per graph
GRAPHS_PER_TILE = 8       # 8 graphs * 16 nodes = 128 rows per tile
TILE = GRAPHS_PER_TILE * N_NODES   # 128
F_IN = 61                 # raw feature dim
F_PAD = 128               # padded feature dim (lane-dense)
H = 32                    # GCN hidden width
H1 = 16                   # lin1 width
N_CLASSES = 3
OUT_PAD = 128             # logits padded to a lane-dense slab


# ----------------------------------------------------------------------------
# Pallas kernel: one grid step = 8 graphs packed block-diagonally in a 128-tile
# ----------------------------------------------------------------------------
def net_fwd_kernel(a_ref, x_ref, pool_ref,
                   w1_ref, b1_ref, w2_ref, b2_ref,
                   w3_ref, b3_ref, w4_ref, b4_ref,
                   lw1_ref, lb1_ref, lw2_ref, lb2_ref,
                   out_ref):
    a = a_ref[...]            # (128, 128) bf16 block-diagonal normalized adjacency
    h = x_ref[...]            # (128, 128) bf16 zero-padded node features

    def gcn_relu(h, w, b):
        # GCNConv: A_hat @ (X @ W) + b, then ReLU.
        # bf16 MXU operands, f32 accumulation; bias-add / ReLU stay in f32.
        xw = jnp.dot(h.astype(jnp.bfloat16), w,
                     preferred_element_type=jnp.float32)
        agg = jnp.dot(a, xw.astype(jnp.bfloat16),
                      preferred_element_type=jnp.float32) + b
        return jnp.maximum(agg, 0.0)

    # conv1..conv4 (+ReLU).  F.dropout(p=0.25, training=False) is the identity.
    # TODO(synk): training-mode dropout (pltpu.prng_random_bits mask) not implemented.
    h = gcn_relu(h, w1_ref[...], b1_ref[...])
    h = gcn_relu(h, w2_ref[...], b2_ref[...])
    h = gcn_relu(h, w3_ref[...], b3_ref[...])
    h = gcn_relu(h, w4_ref[...], b4_ref[...])            # (128, 32) f32

    # per-graph sum pooling as an MXU matmul: (8, 128) @ (128, 32) -> (8, 32)
    pooled = jnp.dot(pool_ref[...], h, preferred_element_type=jnp.float32)

    # head MLP (tiny, f32)
    z = jnp.dot(pooled, lw1_ref[...],
                preferred_element_type=jnp.float32) + lb1_ref[...]
    z = jnp.maximum(z, 0.0)                               # (8, 16)
    z = jnp.dot(z, lw2_ref[...],
                preferred_element_type=jnp.float32) + lb2_ref[...]
    out_ref[...] = z                                      # (8, 128) lane-dense


# ----------------------------------------------------------------------------
# Host-side packing / wrapper
# ----------------------------------------------------------------------------
def _const_spec(shape):
    """Full-array block whose index_map is constant -> DMA'd once, VMEM-resident."""
    nd = len(shape)
    return pl.BlockSpec(shape, lambda *_: (0,) * nd)


def build_pool_matrix():
    groups = jnp.arange(TILE) // N_NODES
    return (jnp.arange(GRAPHS_PER_TILE)[:, None] == groups[None, :]).astype(jnp.float32)


def pack_graphs(a_hats, xs):
    """Block-diagonal-pack 8 graphs per 128-row tile; pad features 61 -> 128."""
    B, N, _ = a_hats.shape
    T = B // GRAPHS_PER_TILE
    a_tiles = jnp.zeros((T, TILE, TILE), jnp.float32)
    a_r = a_hats.reshape(T, GRAPHS_PER_TILE, N, N)
    for g in range(GRAPHS_PER_TILE):
        a_tiles = a_tiles.at[:, g * N:(g + 1) * N, g * N:(g + 1) * N].set(a_r[:, g])
    a_packed = a_tiles.reshape(T * TILE, TILE)
    x_pad = jnp.zeros((B, N, F_PAD), jnp.float32).at[:, :, :F_IN].set(xs)
    x_packed = x_pad.reshape(T * TILE, F_PAD)
    return a_packed, x_packed


def prepare_kernel_params(p):
    """Pad W1 rows (61->128) and lin2 cols (3->128); cast GCN weights to bf16."""
    w1p = jnp.zeros((F_PAD, H), jnp.float32).at[:F_IN].set(p["w1"])
    lw2p = jnp.zeros((H1, OUT_PAD), jnp.float32).at[:, :N_CLASSES].set(p["lw2"])
    lb2p = jnp.zeros((1, OUT_PAD), jnp.float32).at[:, :N_CLASSES].set(p["lb2"])
    return dict(
        w1=w1p.astype(jnp.bfloat16), b1=p["b1"],
        w2=p["w2"].astype(jnp.bfloat16), b2=p["b2"],
        w3=p["w3"].astype(jnp.bfloat16), b3=p["b3"],
        w4=p["w4"].astype(jnp.bfloat16), b4=p["b4"],
        lw1=p["lw1"], lb1=p["lb1"], lw2=lw2p, lb2=lb2p,
    )


def net_forward_batched(a_hats, xs, params):
    """Forward pass for a batch of graphs: a_hats (B,N,N), xs (B,N,61) -> (B,3)."""
    B = a_hats.shape[0]
    assert B % GRAPHS_PER_TILE == 0, "batch must be a multiple of 8 graphs"
    T = B // GRAPHS_PER_TILE

    a_packed, x_packed = pack_graphs(a_hats, xs)
    pool = build_pool_matrix()
    kp = prepare_kernel_params(params)

    args = (a_packed.astype(jnp.bfloat16), x_packed.astype(jnp.bfloat16), pool,
            kp["w1"], kp["b1"], kp["w2"], kp["b2"],
            kp["w3"], kp["b3"], kp["w4"], kp["b4"],
            kp["lw1"], kp["lb1"], kp["lw2"], kp["lb2"])

    batch_spec = pl.BlockSpec((TILE, TILE), lambda t: (t, 0))
    in_specs = [
        batch_spec,                                # A_hat tiles   (per grid step)
        batch_spec,                                # X tiles       (per grid step)
        _const_spec((GRAPHS_PER_TILE, TILE)),      # pooling matrix (resident)
        _const_spec((F_PAD, H)), _const_spec((1, H)),
        _const_spec((H, H)), _const_spec((1, H)),
        _const_spec((H, H)), _const_spec((1, H)),
        _const_spec((H, H)), _const_spec((1, H)),
        _const_spec((H, H1)), _const_spec((1, H1)),
        _const_spec((H1, OUT_PAD)), _const_spec((1, OUT_PAD)),
    ]
    out_spec = pl.BlockSpec((GRAPHS_PER_TILE, OUT_PAD), lambda t: (t, 0))

    flops_per_tile = (4 * (2 * TILE * TILE * H + 2 * TILE * TILE * H)
                      + 2 * GRAPHS_PER_TILE * TILE * H
                      + 2 * GRAPHS_PER_TILE * H * H1
                      + 2 * GRAPHS_PER_TILE * H1 * OUT_PAD)
    bytes_accessed = (sum(int(a.size) * a.dtype.itemsize for a in args)
                      + T * GRAPHS_PER_TILE * OUT_PAD * 4)

    out = pl.pallas_call(
        net_fwd_kernel,
        out_shape=jax.ShapeDtypeStruct((T * GRAPHS_PER_TILE, OUT_PAD), jnp.float32),
        grid=(T,),
        in_specs=in_specs,
        out_specs=out_spec,
        compiler_params=pltpu.CompilerParams(
            dimension_semantics=("parallel",)),
        cost_estimate=pl.CostEstimate(
            flops=int(T * flops_per_tile),
            transcendentals=0,
            bytes_accessed=int(bytes_accessed)),
    )(*args)
    return out[:, :N_CLASSES]                       # (B, 3) per-graph logits


# ----------------------------------------------------------------------------
# Glue: parameter init, dense normalized adjacency, pure-JAX reference
# ----------------------------------------------------------------------------
def make_params(key):
    ks = jax.random.split(key, 6)

    def lin_init(k, fan_in, fan_out):
        scale = 1.0 / jnp.sqrt(jnp.float32(fan_in))
        kw, kb = jax.random.split(k)
        w = jax.random.uniform(kw, (fan_in, fan_out), jnp.float32, -scale, scale)
        b = jax.random.uniform(kb, (1, fan_out), jnp.float32, -scale, scale)
        return w, b

    p = {}
    p["w1"], p["b1"] = lin_init(ks[0], F_IN, H)
    p["w2"], p["b2"] = lin_init(ks[1], H, H)
    p["w3"], p["b3"] = lin_init(ks[2], H, H)
    p["w4"], p["b4"] = lin_init(ks[3], H, H)
    p["lw1"], p["lb1"] = lin_init(ks[4], H, H1)
    p["lw2"], p["lb2"] = lin_init(ks[5], H1, N_CLASSES)
    return p


def normalized_adjacency(edge_index, num_nodes):
    """D^{-1/2}(A + I)D^{-1/2} as a dense (N, N) float32 matrix."""
    src, dst = edge_index[0], edge_index[1]
    adj = jnp.zeros((num_nodes, num_nodes), jnp.float32)
    adj = adj.at[dst, src].set(1.0)
    adj = adj + jnp.eye(num_nodes, dtype=jnp.float32)
    deg = jnp.sum(adj, axis=1)
    dinv = jnp.where(deg > 0, 1.0 / jnp.sqrt(deg), 0.0)
    return adj * dinv[:, None] * dinv[None, :]


def reference_forward(a_hat, x, p):
    """Pure-JAX reference mirroring the kernel's bf16-operand / f32-accum math."""
    a_bf = a_hat.astype(jnp.bfloat16)
    h = x
    for w, b in ((p["w1"], p["b1"]), (p["w2"], p["b2"]),
                 (p["w3"], p["b3"]), (p["w4"], p["b4"])):
        xw = jnp.dot(h.astype(jnp.bfloat16), w.astype(jnp.bfloat16),
                     preferred_element_type=jnp.float32)
        agg = jnp.dot(a_bf, xw.astype(jnp.bfloat16),
                      preferred_element_type=jnp.float32) + b
        h = jnp.maximum(agg, 0.0)
    pooled = jnp.sum(h, axis=0, keepdims=True)
    z = jnp.maximum(pooled @ p["lw1"] + p["lb1"], 0.0)
    z = z @ p["lw2"] + p["lb2"]
    return z[0]


if __name__ == "__main__":
    key = jax.random.PRNGKey(0)
    k_param, k_x = jax.random.split(key)

    B = 16                     # graphs per batch -> 2 grid tiles of 8 graphs each
    N = N_NODES

    # deterministic topologies: bidirectional ring + one graph-dependent chord
    a_list = []
    for g in range(B):
        src = list(range(N)) + [(i + 1) % N for i in range(N)]
        dst = [(i + 1) % N for i in range(N)] + list(range(N))
        c = 2 + (g % (N - 3))
        src += [0, c]
        dst += [c, 0]
        edge_index = jnp.array([src, dst], jnp.int32)
        a_list.append(normalized_adjacency(edge_index, N))
    a_hats = jnp.stack(a_list)                         # (B, N, N)

    xs = jax.random.normal(k_x, (B, N, F_IN), jnp.float32)   # node features
    params = make_params(k_param)

    out = net_forward_batched(a_hats, xs, params)
    out = jax.block_until_ready(out)
    assert out.shape == (B, N_CLASSES)

    ref = jnp.stack([reference_forward(a_hats[b], xs[b], params) for b in range(B)])
    assert jnp.allclose(out, ref, atol=2e-2, rtol=2e-2), (out, ref)
    print("KERNEL_OK")
</pallas_src>

<mosaic_0001>
module attributes {stable_mosaic.version = 11 : i64} {
  func.func @net_fwd_kernel(%arg0: i32, %arg1: memref<128x128xbf16, #tpu.memory_space<vmem>>, %arg2: memref<128x128xbf16, #tpu.memory_space<vmem>>, %arg3: memref<8x128xf32, #tpu.memory_space<vmem>>, %arg4: memref<128x32xbf16, #tpu.memory_space<vmem>>, %arg5: memref<1x32xf32, #tpu.memory_space<vmem>>, %arg6: memref<32x32xbf16, #tpu.memory_space<vmem>>, %arg7: memref<1x32xf32, #tpu.memory_space<vmem>>, %arg8: memref<32x32xbf16, #tpu.memory_space<vmem>>, %arg9: memref<1x32xf32, #tpu.memory_space<vmem>>, %arg10: memref<32x32xbf16, #tpu.memory_space<vmem>>, %arg11: memref<1x32xf32, #tpu.memory_space<vmem>>, %arg12: memref<32x16xf32, #tpu.memory_space<vmem>>, %arg13: memref<1x16xf32, #tpu.memory_space<vmem>>, %arg14: memref<16x128xf32, #tpu.memory_space<vmem>>, %arg15: memref<1x128xf32, #tpu.memory_space<vmem>>, %arg16: memref<8x128xf32, #tpu.memory_space<vmem>>) attributes {dimension_semantics = [#tpu.dimension_semantics<parallel>], iteration_bounds = array<i64: 2>, scalar_prefetch = 0 : i64, scratch_operands = 0 : i64, tpu.core_type = #tpu.core_type<tc>, window_params = [{transform_indices = @transform_0, window_bounds = array<i64: 128, 128>}, {transform_indices = @transform_1, window_bounds = array<i64: 128, 128>}, {pipeline_mode = #tpu.pipeline_mode<synchronous>, transform_indices = @transform_2, window_bounds = array<i64: 8, 128>}, {pipeline_mode = #tpu.pipeline_mode<synchronous>, transform_indices = @transform_3, window_bounds = array<i64: 128, 32>}, {pipeline_mode = #tpu.pipeline_mode<synchronous>, transform_indices = @transform_4, window_bounds = array<i64: 1, 32>}, {pipeline_mode = #tpu.pipeline_mode<synchronous>, transform_indices = @transform_5, window_bounds = array<i64: 32, 32>}, {pipeline_mode = #tpu.pipeline_mode<synchronous>, transform_indices = @transform_6, window_bounds = array<i64: 1, 32>}, {pipeline_mode = #tpu.pipeline_mode<synchronous>, transform_indices = @transform_7, window_bounds = array<i64: 32, 32>}, {pipeline_mode = #tpu.pipeline_mode<synchronous>, transform_indices = @transform_8, window_bounds = array<i64: 1, 32>}, {pipeline_mode = #tpu.pipeline_mode<synchronous>, transform_indices = @transform_9, window_bounds = array<i64: 32, 32>}, {pipeline_mode = #tpu.pipeline_mode<synchronous>, transform_indices = @transform_10, window_bounds = array<i64: 1, 32>}, {pipeline_mode = #tpu.pipeline_mode<synchronous>, transform_indices = @transform_11, window_bounds = array<i64: 32, 16>}, {pipeline_mode = #tpu.pipeline_mode<synchronous>, transform_indices = @transform_12, window_bounds = array<i64: 1, 16>}, {pipeline_mode = #tpu.pipeline_mode<synchronous>, transform_indices = @transform_13, window_bounds = array<i64: 16, 128>}, {pipeline_mode = #tpu.pipeline_mode<synchronous>, transform_indices = @transform_14, window_bounds = array<i64: 1, 128>}, {transform_indices = @transform_15, window_bounds = array<i64: 8, 128>}]} {
    %c0 = arith.constant 0 : index
    %c0_0 = arith.constant 0 : index
    %0 = vector.load %arg1[%c0, %c0_0] : memref<128x128xbf16, #tpu.memory_space<vmem>>, vector<128x128xbf16>
    %c0_1 = arith.constant 0 : index
    %c0_2 = arith.constant 0 : index
    %1 = vector.load %arg2[%c0_1, %c0_2] : memref<128x128xbf16, #tpu.memory_space<vmem>>, vector<128x128xbf16>
    %c0_3 = arith.constant 0 : index
    %c0_4 = arith.constant 0 : index
    %2 = vector.load %arg4[%c0_3, %c0_4] : memref<128x32xbf16, #tpu.memory_space<vmem>>, vector<128x32xbf16>
    %c0_5 = arith.constant 0 : index
    %c0_6 = arith.constant 0 : index
    %3 = vector.load %arg5[%c0_5, %c0_6] : memref<1x32xf32, #tpu.memory_space<vmem>>, vector<1x32xf32>
    %cst = arith.constant dense<0.000000e+00> : vector<128x32xf32>
    %4 = tpu.matmul %1, %2, %cst {dimension_numbers = #tpu.dot_dimension_numbers<[1], [0], [0], [1], [0, 0, 1, 1], [], []>} : vector<128x128xbf16>, vector<128x32xbf16>, vector<128x32xf32> -> vector<128x32xf32>
    %5 = arith.truncf %4 : vector<128x32xf32> to vector<128x32xbf16>
    %cst_7 = arith.constant dense<0.000000e+00> : vector<128x32xf32>
    %6 = tpu.matmul %0, %5, %cst_7 {dimension_numbers = #tpu.dot_dimension_numbers<[1], [0], [0], [1], [0, 0, 1, 1], [], []>} : vector<128x128xbf16>, vector<128x32xbf16>, vector<128x32xf32> -> vector<128x32xf32>
    %7 = vector.broadcast %3 : vector<1x32xf32> to vector<128x32xf32>
    %8 = arith.addf %6, %7 : vector<128x32xf32>
    %cst_8 = arith.constant 0.000000e+00 : f32
    %9 = vector.broadcast %cst_8 : f32 to vector<128x32xf32>
    %10 = arith.maximumf %8, %9 : vector<128x32xf32>
    %c0_9 = arith.constant 0 : index
    %c0_10 = arith.constant 0 : index
    %11 = vector.load %arg6[%c0_9, %c0_10] : memref<32x32xbf16, #tpu.memory_space<vmem>>, vector<32x32xbf16>
    %c0_11 = arith.constant 0 : index
    %c0_12 = arith.constant 0 : index
    %12 = vector.load %arg7[%c0_11, %c0_12] : memref<1x32xf32, #tpu.memory_space<vmem>>, vector<1x32xf32>
    %13 = arith.truncf %10 : vector<128x32xf32> to vector<128x32xbf16>
    %cst_13 = arith.constant dense<0.000000e+00> : vector<128x32xf32>
    %14 = tpu.matmul %13, %11, %cst_13 {dimension_numbers = #tpu.dot_dimension_numbers<[1], [0], [0], [1], [0, 0, 1, 1], [], []>} : vector<128x32xbf16>, vector<32x32xbf16>, vector<128x32xf32> -> vector<128x32xf32>
    %15 = arith.truncf %14 : vector<128x32xf32> to vector<128x32xbf16>
    %cst_14 = arith.constant dense<0.000000e+00> : vector<128x32xf32>
    %16 = tpu.matmul %0, %15, %cst_14 {dimension_numbers = #tpu.dot_dimension_numbers<[1], [0], [0], [1], [0, 0, 1, 1], [], []>} : vector<128x128xbf16>, vector<128x32xbf16>, vector<128x32xf32> -> vector<128x32xf32>
    %17 = vector.broadcast %12 : vector<1x32xf32> to vector<128x32xf32>
    %18 = arith.addf %16, %17 : vector<128x32xf32>
    %cst_15 = arith.constant 0.000000e+00 : f32
    %19 = vector.broadcast %cst_15 : f32 to vector<128x32xf32>
    %20 = arith.maximumf %18, %19 : vector<128x32xf32>
    %c0_16 = arith.constant 0 : index
    %c0_17 = arith.constant 0 : index
    %21 = vector.load %arg8[%c0_16, %c0_17] : memref<32x32xbf16, #tpu.memory_space<vmem>>, vector<32x32xbf16>
    %c0_18 = arith.constant 0 : index
    %c0_19 = arith.constant 0 : index
    %22 = vector.load %arg9[%c0_18, %c0_19] : memref<1x32xf32, #tpu.memory_space<vmem>>, vector<1x32xf32>
    %23 = arith.truncf %20 : vector<128x32xf32> to vector<128x32xbf16>
    %cst_20 = arith.constant dense<0.000000e+00> : vector<128x32xf32>
    %24 = tpu.matmul %23, %21, %cst_20 {dimension_numbers = #tpu.dot_dimension_numbers<[1], [0], [0], [1], [0, 0, 1, 1], [], []>} : vector<128x32xbf16>, vector<32x32xbf16>, vector<128x32xf32> -> vector<128x32xf32>
    %25 = arith.truncf %24 : vector<128x32xf32> to vector<128x32xbf16>
    %cst_21 = arith.constant dense<0.000000e+00> : vector<128x32xf32>
    %26 = tpu.matmul %0, %25, %cst_21 {dimension_numbers = #tpu.dot_dimension_numbers<[1], [0], [0], [1], [0, 0, 1, 1], [], []>} : vector<128x128xbf16>, vector<128x32xbf16>, vector<128x32xf32> -> vector<128x32xf32>
    %27 = vector.broadcast %22 : vector<1x32xf32> to vector<128x32xf32>
    %28 = arith.addf %26, %27 : vector<128x32xf32>
    %cst_22 = arith.constant 0.000000e+00 : f32
    %29 = vector.broadcast %cst_22 : f32 to vector<128x32xf32>
    %30 = arith.maximumf %28, %29 : vector<128x32xf32>
    %c0_23 = arith.constant 0 : index
    %c0_24 = arith.constant 0 : index
    %31 = vector.load %arg10[%c0_23, %c0_24] : memref<32x32xbf16, #tpu.memory_space<vmem>>, vector<32x32xbf16>
    %c0_25 = arith.constant 0 : index
    %c0_26 = arith.constant 0 : index
    %32 = vector.load %arg11[%c0_25, %c0_26] : memref<1x32xf32, #tpu.memory_space<vmem>>, vector<1x32xf32>
    %33 = arith.truncf %30 : vector<128x32xf32> to vector<128x32xbf16>
    %cst_27 = arith.constant dense<0.000000e+00> : vector<128x32xf32>
    %34 = tpu.matmul %33, %31, %cst_27 {dimension_numbers = #tpu.dot_dimension_numbers<[1], [0], [0], [1], [0, 0, 1, 1], [], []>} : vector<128x32xbf16>, vector<32x32xbf16>, vector<128x32xf32> -> vector<128x32xf32>
    %35 = arith.truncf %34 : vector<128x32xf32> to vector<128x32xbf16>
    %cst_28 = arith.constant dense<0.000000e+00> : vector<128x32xf32>
    %36 = tpu.matmul %0, %35, %cst_28 {dimension_numbers = #tpu.dot_dimension_numbers<[1], [0], [0], [1], [0, 0, 1, 1], [], []>} : vector<128x128xbf16>, vector<128x32xbf16>, vector<128x32xf32> -> vector<128x32xf32>
    %37 = vector.broadcast %32 : vector<1x32xf32> to vector<128x32xf32>
    %38 = arith.addf %36, %37 : vector<128x32xf32>
    %cst_29 = arith.constant 0.000000e+00 : f32
    %39 = vector.broadcast %cst_29 : f32 to vector<128x32xf32>
    %40 = arith.maximumf %38, %39 : vector<128x32xf32>
    %c0_30 = arith.constant 0 : index
    %c0_31 = arith.constant 0 : index
    %41 = vector.load %arg3[%c0_30, %c0_31] : memref<8x128xf32, #tpu.memory_space<vmem>>, vector<8x128xf32>
    %cst_32 = arith.constant dense<0.000000e+00> : vector<8x32xf32>
    %42 = tpu.matmul %41, %40, %cst_32 {dimension_numbers = #tpu.dot_dimension_numbers<[1], [0], [0], [1], [0, 0, 1, 1], [], []>} : vector<8x128xf32>, vector<128x32xf32>, vector<8x32xf32> -> vector<8x32xf32>
    %c0_33 = arith.constant 0 : index
    %c0_34 = arith.constant 0 : index
    %43 = vector.load %arg12[%c0_33, %c0_34] : memref<32x16xf32, #tpu.memory_space<vmem>>, vector<32x16xf32>
    %cst_35 = arith.constant dense<0.000000e+00> : vector<8x16xf32>
    %44 = tpu.matmul %42, %43, %cst_35 {dimension_numbers = #tpu.dot_dimension_numbers<[1], [0], [0], [1], [0, 0, 1, 1], [], []>} : vector<8x32xf32>, vector<32x16xf32>, vector<8x16xf32> -> vector<8x16xf32>
    %c0_36 = arith.constant 0 : index
    %c0_37 = arith.constant 0 : index
    %45 = vector.load %arg13[%c0_36, %c0_37] : memref<1x16xf32, #tpu.memory_space<vmem>>, vector<1x16xf32>
    %46 = vector.broadcast %45 : vector<1x16xf32> to vector<8x16xf32>
    %47 = arith.addf %44, %46 : vector<8x16xf32>
    %cst_38 = arith.constant 0.000000e+00 : f32
    %48 = vector.broadcast %cst_38 : f32 to vector<8x16xf32>
    %49 = arith.maximumf %47, %48 : vector<8x16xf32>
    %c0_39 = arith.constant 0 : index
    %c0_40 = arith.constant 0 : index
    %50 = vector.load %arg14[%c0_39, %c0_40] : memref<16x128xf32, #tpu.memory_space<vmem>>, vector<16x128xf32>
    %cst_41 = arith.constant dense<0.000000e+00> : vector<8x128xf32>
    %51 = tpu.matmul %49, %50, %cst_41 {dimension_numbers = #tpu.dot_dimension_numbers<[1], [0], [0], [1], [0, 0, 1, 1], [], []>} : vector<8x16xf32>, vector<16x128xf32>, vector<8x128xf32> -> vector<8x128xf32>
    %c0_42 = arith.constant 0 : index
    %c0_43 = arith.constant 0 : index
    %52 = vector.load %arg15[%c0_42, %c0_43] : memref<1x128xf32, #tpu.memory_space<vmem>>, vector<1x128xf32>
    %53 = vector.broadcast %52 : vector<1x128xf32> to vector<8x128xf32>
    %54 = arith.addf %51, %53 : vector<8x128xf32>
    %c0_44 = arith.constant 0 : index
    %c0_45 = arith.constant 0 : index
    %55 = vector.load %arg16[%c0_44, %c0_45] : memref<8x128xf32, #tpu.memory_space<vmem>>, vector<8x128xf32>
    tpu.vector_store %arg16[%c0_44, %c0_45], %54 {strides = array<i32>} : memref<8x128xf32, #tpu.memory_space<vmem>>, vector<8x128xf32>,
    return
  }
  func.func @transform_0(%arg0: i32) -> (i32, i32) {
    %c0_i32 = arith.constant 0 : i32
    %c0_i32_0 = arith.constant 0 : i32
    return %arg0, %c0_i32 : i32, i32
  }
  func.func @transform_1(%arg0: i32) -> (i32, i32) {
    %c0_i32 = arith.constant 0 : i32
    %c0_i32_0 = arith.constant 0 : i32
    return %arg0, %c0_i32 : i32, i32
  }
  func.func @transform_2(%arg0: i32) -> (i32, i32) {
    %c0_i32 = arith.constant 0 : i32
    %c0_i32_0 = arith.constant 0 : i32
    %c0_i32_1 = arith.constant 0 : i32
    return %c0_i32, %c0_i32_0 : i32, i32
  }
  func.func @transform_3(%arg0: i32) -> (i32, i32) {
    %c0_i32 = arith.constant 0 : i32
    %c0_i32_0 = arith.constant 0 : i32
    %c0_i32_1 = arith.constant 0 : i32
    return %c0_i32, %c0_i32_0 : i32, i32
  }
  func.func @transform_4(%arg0: i32) -> (i32, i32) {
    %c0_i32 = arith.constant 0 : i32
    %c0_i32_0 = arith.constant 0 : i32
    %c0_i32_1 = arith.constant 0 : i32
    return %c0_i32, %c0_i32_0 : i32, i32
  }
  func.func @transform_5(%arg0: i32) -> (i32, i32) {
    %c0_i32 = arith.constant 0 : i32
    %c0_i32_0 = arith.constant 0 : i32
    %c0_i32_1 = arith.constant 0 : i32
    return %c0_i32, %c0_i32_0 : i32, i32
  }
  func.func @transform_6(%arg0: i32) -> (i32, i32) {
    %c0_i32 = arith.constant 0 : i32
    %c0_i32_0 = arith.constant 0 : i32
    %c0_i32_1 = arith.constant 0 : i32
    return %c0_i32, %c0_i32_0 : i32, i32
  }
  func.func @transform_7(%arg0: i32) -> (i32, i32) {
    %c0_i32 = arith.constant 0 : i32
    %c0_i32_0 = arith.constant 0 : i32
    %c0_i32_1 = arith.constant 0 : i32
    return %c0_i32, %c0_i32_0 : i32, i32
  }
  func.func @transform_8(%arg0: i32) -> (i32, i32) {
    %c0_i32 = arith.constant 0 : i32
    %c0_i32_0 = arith.constant 0 : i32
    %c0_i32_1 = arith.constant 0 : i32
    return %c0_i32, %c0_i32_0 : i32, i32
  }
  func.func @transform_9(%arg0: i32) -> (i32, i32) {
    %c0_i32 = arith.constant 0 : i32
    %c0_i32_0 = arith.constant 0 : i32
    %c0_i32_1 = arith.constant 0 : i32
    return %c0_i32, %c0_i32_0 : i32, i32
  }
  func.func @transform_10(%arg0: i32) -> (i32, i32) {
    %c0_i32 = arith.constant 0 : i32
    %c0_i32_0 = arith.constant 0 : i32
    %c0_i32_1 = arith.constant 0 : i32
    return %c0_i32, %c0_i32_0 : i32, i32
  }
  func.func @transform_11(%arg0: i32) -> (i32, i32) {
    %c0_i32 = arith.constant 0 : i32
    %c0_i32_0 = arith.constant 0 : i32
    %c0_i32_1 = arith.constant 0 : i32
    return %c0_i32, %c0_i32_0 : i32, i32
  }
  func.func @transform_12(%arg0: i32) -> (i32, i32) {
    %c0_i32 = arith.constant 0 : i32
    %c0_i32_0 = arith.constant 0 : i32
    %c0_i32_1 = arith.constant 0 : i32
    return %c0_i32, %c0_i32_0 : i32, i32
  }
  func.func @transform_13(%arg0: i32) -> (i32, i32) {
    %c0_i32 = arith.constant 0 : i32
    %c0_i32_0 = arith.constant 0 : i32
    %c0_i32_1 = arith.constant 0 : i32
    return %c0_i32, %c0_i32_0 : i32, i32
  }
  func.func @transform_14(%arg0: i32) -> (i32, i32) {
    %c0_i32 = arith.constant 0 : i32
    %c0_i32_0 = arith.constant 0 : i32
    %c0_i32_1 = arith.constant 0 : i32
    return %c0_i32, %c0_i32_0 : i32, i32
  }
  func.func @transform_15(%arg0: i32) -> (i32, i32) {
    %c0_i32 = arith.constant 0 : i32
    %c0_i32_0 = arith.constant 0 : i32
    return %arg0, %c0_i32 : i32, i32
  }
}

</mosaic_0001>

<llo_original>
// kernel: tpu_custom_call.1
$region0: #{tpu_custom_call.1}
  #allocation0 [shape = 'u32[]', space=smem, size = 0x4, offset = 0x4, fixed_abs, tag = 'smem constant byte address 0x4 - core index']
  #allocation1 [shape = 'u32[72,128]{1,0:T(1,128)}', space=vmem, size = 0x9000, scoped, tag = 'internal scratch']
  %s0 = inlined_call_operand.vmem [shape: bf16[256,128], index: 0, kind: input, shape index: {}]
  %s1 = inlined_call_operand.hbm [shape: bf16[256,128], index: 1, kind: input, shape index: {}]
  %s2 = inlined_call_operand.hbm [shape: f32[8,128], index: 2, kind: input, shape index: {}]
  %s3 = inlined_call_operand.vmem [shape: bf16[128,32], index: 3, kind: input, shape index: {}]
  %s4 = inlined_call_operand.vmem [shape: f32[1,32], index: 4, kind: input, shape index: {}]
  %s5 = inlined_call_operand.hbm [shape: bf16[32,32], index: 5, kind: input, shape index: {}]
  %s6 = inlined_call_operand.vmem [shape: f32[1,32], index: 6, kind: input, shape index: {}]
  %s7 = inlined_call_operand.hbm [shape: bf16[32,32], index: 7, kind: input, shape index: {}]
  %s8 = inlined_call_operand.vmem [shape: f32[1,32], index: 8, kind: input, shape index: {}]
  %s9 = inlined_call_operand.hbm [shape: bf16[32,32], index: 9, kind: input, shape index: {}]
  %s10 = inlined_call_operand.vmem [shape: f32[1,32], index: 10, kind: input, shape index: {}]
  %s11 = inlined_call_operand.vmem [shape: f32[32,16], index: 11, kind: input, shape index: {}]
  %s12 = inlined_call_operand.vmem [shape: f32[1,16], index: 12, kind: input, shape index: {}]
  %s13 = inlined_call_operand.hbm [shape: f32[16,128], index: 13, kind: input, shape index: {}]
  %s14 = inlined_call_operand.vmem [shape: f32[1,128], index: 14, kind: input, shape index: {}]
  %s15 = inlined_call_operand.hbm [shape: f32[16,128], index: 15, kind: output, shape index: {}]
  %s16 = sld [smem:[#allocation0]]
  $region117: #{tpu_custom_call.1} parent=0
    _
  %s18 = ssub.s32 1, %s16
  %s19 = scalar_select 0, %s18, %s16
  $region1: #{tpu_custom_call.1} parent=0
    #allocation2 [shape = 'u8[65536]{0}', space=vmem, size = 0x10000, scoped, tag = 'input window, operand 1']
    #allocation3 [shape = 's32[2]{0}', space=sflag, size = 0x8, scoped, tag = 'scoped memory for tpu_custom_call.1']
    #allocation4 [shape = 's32[2]{0}', space=sflag, size = 0x8, scoped, tag = 'scoped memory for tpu_custom_call.1']
    #allocation5 [shape = 'u8[4096]{0}', space=vmem, size = 0x1000, scoped, tag = 'input window, operand 2, single buffered']
    #allocation6 [shape = 's32[1]{0}', space=sflag, size = 0x4, scoped, tag = 'scoped memory for tpu_custom_call.1']
    #allocation7 [shape = 'u8[8192]{0}', space=vmem, size = 0x2000, scoped, tag = 'input window, operand 5, single buffered']
    #allocation8 [shape = 'u8[8192]{0}', space=vmem, size = 0x2000, scoped, tag = 'input window, operand 7, single buffered']
    #allocation9 [shape = 's32[1]{0}', space=sflag, size = 0x4, scoped, tag = 'scoped memory for tpu_custom_call.1']
    #allocation10 [shape = 'u8[8192]{0}', space=vmem, size = 0x2000, scoped, tag = 'input window, operand 9, single buffered']
    #allocation11 [shape = 'u8[8192]{0}', space=vmem, size = 0x2000, scoped, tag = 'input window, operand 13, single buffered']
    #allocation12 [shape = 's32[1]{0}', space=sflag, size = 0x4, scoped, tag = 'scoped memory for tpu_custom_call.1']
    #allocation13 [shape = 'u8[8192]{0}', space=vmem, size = 0x2000, scoped, tag = 'output window, operand 0']
    %20 = vsyncpa [#allocation3], 0
    %s21 = scalar_lea.sflag [#allocation3], 1
    %22 = vsyncpa %s21, 0
    %23 = vsyncpa [#allocation6], 0
    %24 = vsyncpa [#allocation9], 0
    %25 = vsyncpa [#allocation12], 0
    %26 = vsyncpa [#allocation4], 0
    %s27 = scalar_lea.sflag [#allocation4], 1
    %28 = vsyncpa %s27, 0
    loop: start=0, step=1, limit=4
    $region2: #{tpu_custom_call.1} parent=1 // loop_pre_header
      _
    $region3: #{tpu_custom_call.1} parent=1 // loop_header
      %s30 = sphi 0, %s34
      %p31 = scmp.ge.s32.totalorder %s30, 4
      %s40 = sphi 0, %s42
      %s43 = sphi 0, %s40
      %s44 = sphi 0, %s43
      %s60 = sphi 0, %s44
      %s66 = sphi 0, %s68
      %s69 = sphi 0, %s66
      %s70 = sphi 0, %s69
      %s86 = sphi 0, %s70
      %s90 = sphi 0, %s90
      %s92 = sphi 0, %s90
      %s93 = sphi 0, %s92
      %s107 = sphi 0, %s93
      %s111 = sphi 0, %s111
      %s113 = sphi 0, %s111
      %s114 = sphi 0, %s113
      %s128 = sphi 0, %s114
      %s132 = sphi 0, %s132
      %s134 = sphi 0, %s132
      %s135 = sphi 0, %s134
      %s149 = sphi 0, %s135
      %s153 = sphi 0, %s153
      %s155 = sphi 0, %s153
      %s156 = sphi 0, %s155
      %s170 = sphi 0, %s156
      %s174 = sphi 0, %s174
      %s176 = sphi 0, %s174
      %s177 = sphi 0, %s176
      %s191 = sphi 0, %s177
      %s195 = sphi 0, %s195
      %s197 = sphi 0, %s195
      %s198 = sphi 0, %s197
      %s212 = sphi 0, %s198
      %s216 = sphi 0, %s216
      %s218 = sphi 0, %s216
      %s219 = sphi 0, %s218
      %s233 = sphi 0, %s219
      %s237 = sphi 0, %s237
      %s239 = sphi 0, %s237
      %s240 = sphi 0, %s239
      %s254 = sphi 0, %s240
      %s258 = sphi 0, %s258
      %s260 = sphi 0, %s258
      %s261 = sphi 0, %s260
      %s275 = sphi 0, %s261
      %s279 = sphi 0, %s279
      %s281 = sphi 0, %s279
      %s282 = sphi 0, %s281
      %s296 = sphi 0, %s282
      %s300 = sphi 0, %s300
      %s302 = sphi 0, %s300
      %s303 = sphi 0, %s302
      %s317 = sphi 0, %s303
      %s321 = sphi 0, %s321
      %s323 = sphi 0, %s321
      %s324 = sphi 0, %s323
      %s338 = sphi 0, %s324
      %s342 = sphi 0, %s342
      %s344 = sphi 0, %s342
      %s345 = sphi 0, %s344
      %s359 = sphi 0, %s345
      %s365 = sphi 0, %s367
      %s368 = sphi 0, %s365
      %s369 = sphi 0, %s368
      %s385 = sphi 0, %s369
    $region4: #{tpu_custom_call.1} parent=1 // loop_header_branch
      %33 = sbr.rel (%p31) target = $region8
    $region5: #{tpu_custom_call.1} parent=1 // loop_body
      %s35 = ssub.s32 %s30, 1
      %s36 = ssub.s32 %s30, 2
      %s37 = sadd.s32 %s30, 1
      %s38 = ssub.s32 %s30, %s37
      %p39 = scmp.eq.s32.totalorder %s38, 0
      %s41 = sadd.s32 %s40, 1
      %s42 = scalar_select %p39, %s40, %s41
      %p45 = pneg %p39
      %p46 = scmp.eq.s32.totalorder %s30, 1
      %p47 = por %p45, %p46
      %p48 = scmp.ne.s32.totalorder %s40, %s43
      %p49 = scmp.eq.s32.totalorder %s30, 0
      %p50 = por %p48, %p49
      %p51 = scmp.ne.s32.totalorder %s40, %s43
      %p52 = scmp.eq.s32.totalorder %s35, 1
      %p53 = por %p51, %p52
      %p54 = scmp.ne.s32.totalorder %s43, %s44
      %p55 = scmp.eq.s32.totalorder %s35, 0
      %p56 = por %p54, %p55
      %p57 = scmp.ne.s32.totalorder %s43, %s44
      %p58 = scmp.eq.s32.totalorder %s36, 1
      %p59 = por %p57, %p58
      %p61 = scmp.ne.s32.totalorder %s44, %s60
      %p62 = scmp.eq.s32.totalorder %s36, 0
      %p63 = por %p61, %p62
      %s64 = ssub.s32 %s30, %s37
      %p65 = scmp.eq.s32.totalorder %s64, 0
      %s67 = sadd.s32 %s66, 1
      %s68 = scalar_select %p65, %s66, %s67
      %p71 = pneg %p65
      %p72 = scmp.eq.s32.totalorder %s30, 1
      %p73 = por %p71, %p72
      %p74 = scmp.ne.s32.totalorder %s66, %s69
      %p75 = scmp.eq.s32.totalorder %s30, 0
      %p76 = por %p74, %p75
      %p77 = scmp.ne.s32.totalorder %s66, %s69
      %p78 = scmp.eq.s32.totalorder %s35, 1
      %p79 = por %p77, %p78
      %p80 = scmp.ne.s32.totalorder %s69, %s70
      %p81 = scmp.eq.s32.totalorder %s35, 0
      %p82 = por %p80, %p81
      %p83 = scmp.ne.s32.totalorder %s69, %s70
      %p84 = scmp.eq.s32.totalorder %s36, 1
      %p85 = por %p83, %p84
      %p87 = scmp.ne.s32.totalorder %s70, %s86
      %p88 = scmp.eq.s32.totalorder %s36, 0
      %p89 = por %p87, %p88
      %s91 = sadd.s32 %s90, 1
      %p94 = scmp.eq.s32.totalorder %s30, 1
      %p95 = scmp.ne.s32.totalorder %s90, %s92
      %p96 = scmp.eq.s32.totalorder %s30, 0
      %p97 = por %p95, %p96
      %p98 = scmp.ne.s32.totalorder %s90, %s92
      %p99 = scmp.eq.s32.totalorder %s35, 1
      %p100 = por %p98, %p99
      %p101 = scmp.ne.s32.totalorder %s92, %s93
      %p102 = scmp.eq.s32.totalorder %s35, 0
      %p103 = por %p101, %p102
      %p104 = scmp.ne.s32.totalorder %s92, %s93
      %p105 = scmp.eq.s32.totalorder %s36, 1
      %p106 = por %p104, %p105
      %p108 = scmp.ne.s32.totalorder %s93, %s107
      %p109 = scmp.eq.s32.totalorder %s36, 0
      %p110 = por %p108, %p109
      %s112 = sadd.s32 %s111, 1
      %p115 = scmp.eq.s32.totalorder %s30, 1
      %p116 = scmp.ne.s32.totalorder %s111, %s113
      %p117 = scmp.eq.s32.totalorder %s30, 0
      %p118 = por %p116, %p117
      %p119 = scmp.ne.s32.totalorder %s111, %s113
      %p120 = scmp.eq.s32.totalorder %s35, 1
      %p121 = por %p119, %p120
      %p122 = scmp.ne.s32.totalorder %s113, %s114
      %p123 = scmp.eq.s32.totalorder %s35, 0
      %p124 = por %p122, %p123
      %p125 = scmp.ne.s32.totalorder %s113, %s114
      %p126 = scmp.eq.s32.totalorder %s36, 1
      %p127 = por %p125, %p126
      %p129 = scmp.ne.s32.totalorder %s114, %s128
      %p130 = scmp.eq.s32.totalorder %s36, 0
      %p131 = por %p129, %p130
      %s133 = sadd.s32 %s132, 1
      %p136 = scmp.eq.s32.totalorder %s30, 1
      %p137 = scmp.ne.s32.totalorder %s132, %s134
      %p138 = scmp.eq.s32.totalorder %s30, 0
      %p139 = por %p137, %p138
      %p140 = scmp.ne.s32.totalorder %s132, %s134
      %p141 = scmp.eq.s32.totalorder %s35, 1
      %p142 = por %p140, %p141
      %p143 = scmp.ne.s32.totalorder %s134, %s135
      %p144 = scmp.eq.s32.totalorder %s35, 0
      %p145 = por %p143, %p144
      %p146 = scmp.ne.s32.totalorder %s134, %s135
      %p147 = scmp.eq.s32.totalorder %s36, 1
      %p148 = por %p146, %p147
      %p150 = scmp.ne.s32.totalorder %s135, %s149
      %p151 = scmp.eq.s32.totalorder %s36, 0
      %p152 = por %p150, %p151
      %s154 = sadd.s32 %s153, 1
      %p157 = scmp.eq.s32.totalorder %s30, 1
      %p158 = scmp.ne.s32.totalorder %s153, %s155
      %p159 = scmp.eq.s32.totalorder %s30, 0
      %p160 = por %p158, %p159
      %p161 = scmp.ne.s32.totalorder %s153, %s155
      %p162 = scmp.eq.s32.totalorder %s35, 1
      %p163 = por %p161, %p162
      %p164 = scmp.ne.s32.totalorder %s155, %s156
      %p165 = scmp.eq.s32.totalorder %s35, 0
      %p166 = por %p164, %p165
      %p167 = scmp.ne.s32.totalorder %s155, %s156
      %p168 = scmp.eq.s32.totalorder %s36, 1
      %p169 = por %p167, %p168
      %p171 = scmp.ne.s32.totalorder %s156, %s170
      %p172 = scmp.eq.s32.totalorder %s36, 0
      %p173 = por %p171, %p172
      %s175 = sadd.s32 %s174, 1
      %p178 = scmp.eq.s32.totalorder %s30, 1
      %p179 = scmp.ne.s32.totalorder %s174, %s176
      %p180 = scmp.eq.s32.totalorder %s30, 0
      %p181 = por %p179, %p180
      %p182 = scmp.ne.s32.totalorder %s174, %s176
      %p183 = scmp.eq.s32.totalorder %s35, 1
      %p184 = por %p182, %p183
      %p185 = scmp.ne.s32.totalorder %s176, %s177
      %p186 = scmp.eq.s32.totalorder %s35, 0
      %p187 = por %p185, %p186
      %p188 = scmp.ne.s32.totalorder %s176, %s177
      %p189 = scmp.eq.s32.totalorder %s36, 1
      %p190 = por %p188, %p189
      %p192 = scmp.ne.s32.totalorder %s177, %s191
      %p193 = scmp.eq.s32.totalorder %s36, 0
      %p194 = por %p192, %p193
      %s196 = sadd.s32 %s195, 1
      %p199 = scmp.eq.s32.totalorder %s30, 1
      %p200 = scmp.ne.s32.totalorder %s195, %s197
      %p201 = scmp.eq.s32.totalorder %s30, 0
      %p202 = por %p200, %p201
      %p203 = scmp.ne.s32.totalorder %s195, %s197
      %p204 = scmp.eq.s32.totalorder %s35, 1
      %p205 = por %p203, %p204
      %p206 = scmp.ne.s32.totalorder %s197, %s198
      %p207 = scmp.eq.s32.totalorder %s35, 0
      %p208 = por %p206, %p207
      %p209 = scmp.ne.s32.totalorder %s197, %s198
      %p210 = scmp.eq.s32.totalorder %s36, 1
      %p211 = por %p209, %p210
      %p213 = scmp.ne.s32.totalorder %s198, %s212
      %p214 = scmp.eq.s32.totalorder %s36, 0
      %p215 = por %p213, %p214
      %s217 = sadd.s32 %s216, 1
      %p220 = scmp.eq.s32.totalorder %s30, 1
      %p221 = scmp.ne.s32.totalorder %s216, %s218
      %p222 = scmp.eq.s32.totalorder %s30, 0
      %p223 = por %p221, %p222
      %p224 = scmp.ne.s32.totalorder %s216, %s218
      %p225 = scmp.eq.s32.totalorder %s35, 1
      %p226 = por %p224, %p225
      %p227 = scmp.ne.s32.totalorder %s218, %s219
      %p228 = scmp.eq.s32.totalorder %s35, 0
      %p229 = por %p227, %p228
      %p230 = scmp.ne.s32.totalorder %s218, %s219
      %p231 = scmp.eq.s32.totalorder %s36, 1
      %p232 = por %p230, %p231
      %p234 = scmp.ne.s32.totalorder %s219, %s233
      %p235 = scmp.eq.s32.totalorder %s36, 0
      %p236 = por %p234, %p235
      %s238 = sadd.s32 %s237, 1
      %p241 = scmp.eq.s32.totalorder %s30, 1
      %p242 = scmp.ne.s32.totalorder %s237, %s239
      %p243 = scmp.eq.s32.totalorder %s30, 0
      %p244 = por %p242, %p243
      %p245 = scmp.ne.s32.totalorder %s237, %s239
      %p246 = scmp.eq.s32.totalorder %s35, 1
      %p247 = por %p245, %p246
      %p248 = scmp.ne.s32.totalorder %s239, %s240
      %p249 = scmp.eq.s32.totalorder %s35, 0
      %p250 = por %p248, %p249
      %p251 = scmp.ne.s32.totalorder %s239, %s240
      %p252 = scmp.eq.s32.totalorder %s36, 1
      %p253 = por %p251, %p252
      %p255 = scmp.ne.s32.totalorder %s240, %s254
      %p256 = scmp.eq.s32.totalorder %s36, 0
      %p257 = por %p255, %p256
      %s259 = sadd.s32 %s258, 1
      %p262 = scmp.eq.s32.totalorder %s30, 1
      %p263 = scmp.ne.s32.totalorder %s258, %s260
      %p264 = scmp.eq.s32.totalorder %s30, 0
      %p265 = por %p263, %p264
      %p266 = scmp.ne.s32.totalorder %s258, %s260
      %p267 = scmp.eq.s32.totalorder %s35, 1
      %p268 = por %p266, %p267
      %p269 = scmp.ne.s32.totalorder %s260, %s261
      %p270 = scmp.eq.s32.totalorder %s35, 0
      %p271 = por %p269, %p270
      %p272 = scmp.ne.s32.totalorder %s260, %s261
      %p273 = scmp.eq.s32.totalorder %s36, 1
      %p274 = por %p272, %p273
      %p276 = scmp.ne.s32.totalorder %s261, %s275
      %p277 = scmp.eq.s32.totalorder %s36, 0
      %p278 = por %p276, %p277
      %s280 = sadd.s32 %s279, 1
      %p283 = scmp.eq.s32.totalorder %s30, 1
      %p284 = scmp.ne.s32.totalorder %s279, %s281
      %p285 = scmp.eq.s32.totalorder %s30, 0
      %p286 = por %p284, %p285
      %p287 = scmp.ne.s32.totalorder %s279, %s281
      %p288 = scmp.eq.s32.totalorder %s35, 1
      %p289 = por %p287, %p288
      %p290 = scmp.ne.s32.totalorder %s281, %s282
      %p291 = scmp.eq.s32.totalorder %s35, 0
      %p292 = por %p290, %p291
      %p293 = scmp.ne.s32.totalorder %s281, %s282
      %p294 = scmp.eq.s32.totalorder %s36, 1
      %p295 = por %p293, %p294
      %p297 = scmp.ne.s32.totalorder %s282, %s296
      %p298 = scmp.eq.s32.totalorder %s36, 0
      %p299 = por %p297, %p298
      %s301 = sadd.s32 %s300, 1
      %p304 = scmp.eq.s32.totalorder %s30, 1
      %p305 = scmp.ne.s32.totalorder %s300, %s302
      %p306 = scmp.eq.s32.totalorder %s30, 0
      %p307 = por %p305, %p306
      %p308 = scmp.ne.s32.totalorder %s300, %s302
      %p309 = scmp.eq.s32.totalorder %s35, 1
      %p310 = por %p308, %p309
      %p311 = scmp.ne.s32.totalorder %s302, %s303
      %p312 = scmp.eq.s32.totalorder %s35, 0
      %p313 = por %p311, %p312
      %p314 = scmp.ne.s32.totalorder %s302, %s303
      %p315 = scmp.eq.s32.totalorder %s36, 1
      %p316 = por %p314, %p315
      %p318 = scmp.ne.s32.totalorder %s303, %s317
      %p319 = scmp.eq.s32.totalorder %s36, 0
      %p320 = por %p318, %p319
      %s322 = sadd.s32 %s321, 1
      %p325 = scmp.eq.s32.totalorder %s30, 1
      %p326 = scmp.ne.s32.totalorder %s321, %s323
      %p327 = scmp.eq.s32.totalorder %s30, 0
      %p328 = por %p326, %p327
      %p329 = scmp.ne.s32.totalorder %s321, %s323
      %p330 = scmp.eq.s32.totalorder %s35, 1
      %p331 = por %p329, %p330
      %p332 = scmp.ne.s32.totalorder %s323, %s324
      %p333 = scmp.eq.s32.totalorder %s35, 0
      %p334 = por %p332, %p333
      %p335 = scmp.ne.s32.totalorder %s323, %s324
      %p336 = scmp.eq.s32.totalorder %s36, 1
      %p337 = por %p335, %p336
      %p339 = scmp.ne.s32.totalorder %s324, %s338
      %p340 = scmp.eq.s32.totalorder %s36, 0
      %p341 = por %p339, %p340
      %s343 = sadd.s32 %s342, 1
      %p346 = scmp.eq.s32.totalorder %s30, 1
      %p347 = scmp.ne.s32.totalorder %s342, %s344
      %p348 = scmp.eq.s32.totalorder %s30, 0
      %p349 = por %p347, %p348
      %p350 = scmp.ne.s32.totalorder %s342, %s344
      %p351 = scmp.eq.s32.totalorder %s35, 1
      %p352 = por %p350, %p351
      %p353 = scmp.ne.s32.totalorder %s344, %s345
      %p354 = scmp.eq.s32.totalorder %s35, 0
      %p355 = por %p353, %p354
      %p356 = scmp.ne.s32.totalorder %s344, %s345
      %p357 = scmp.eq.s32.totalorder %s36, 1
      %p358 = por %p356, %p357
      %p360 = scmp.ne.s32.totalorder %s345, %s359
      %p361 = scmp.eq.s32.totalorder %s36, 0
      %p362 = por %p360, %p361
      %s363 = ssub.s32 %s30, %s37
      %p364 = scmp.eq.s32.totalorder %s363, 0
      %s366 = sadd.s32 %s365, 1
      %s367 = scalar_select %p364, %s365, %s366
      %p370 = pneg %p364
      %p371 = scmp.eq.s32.totalorder %s30, 1
      %p372 = por %p370, %p371
      %p373 = scmp.ne.s32.totalorder %s365, %s368
      %p374 = scmp.eq.s32.totalorder %s30, 0
      %p375 = por %p373, %p374
      %p376 = scmp.ne.s32.totalorder %s365, %s368
      %p377 = scmp.eq.s32.totalorder %s35, 1
      %p378 = por %p376, %p377
      %p379 = scmp.ne.s32.totalorder %s368, %s369
      %p380 = scmp.eq.s32.totalorder %s35, 0
      %p381 = por %p379, %p380
      %p382 = scmp.ne.s32.totalorder %s368, %s369
      %p383 = scmp.eq.s32.totalorder %s36, 1
      %p384 = por %p382, %p383
      %p386 = scmp.ne.s32.totalorder %s369, %s385
      %p387 = scmp.eq.s32.totalorder %s36, 0
      %p388 = por %p386, %p387
      %p389 = scmp.le.s32.totalorder 1, %s30
      %p390 = scmp.lt.s32.totalorder %s30, 3
      %p391 = pnand %p389, %p390
      %p392 = pneg %p391
      // Predicated region
      $region9: #{tpu_custom_call.1} parent=5 // pred_check
        _
      $region10: #{tpu_custom_call.1} parent=5 // pred_check_branch
        %394 = sbr.rel (%p391) target = $region12
      $region11: #{tpu_custom_call.1} parent=5 // pred_region
        %s395 = ssub.s32 %s30, 1
        // Predicated region
        $region13: #{tpu_custom_call.1} parent=11 // pred_check
          %p396 = pneg %p103
        $region14: #{tpu_custom_call.1} parent=11 // pred_check_branch
          %398 = sbr.rel (%p396) target = $region16
        $region15: #{tpu_custom_call.1} parent=11 // pred_region
          %400 = vsyncadd [#allocation6], 0
          %s402 = sshll.u32 %s2, 4
          %s403 = int_to_ptr.hbm [resolvable:$true] %s402
          %s404 = sshll.u32 [#allocation5], 4
          %s405 = int_to_ptr.vmem [resolvable:$true] %s404
          %407 = dma.hbm_to_vmem [thread:$0]  %s403, 128, %s405, [#allocation6]
        $region16: #{tpu_custom_call.1} parent=11 // pred_fallthru
          _
        // Predicated region
        $region17: #{tpu_custom_call.1} parent=11 // pred_check
          %p408 = pneg %p124
        $region18: #{tpu_custom_call.1} parent=11 // pred_check_branch
          %410 = sbr.rel (%p408) target = $region20
        $region19: #{tpu_custom_call.1} parent=11 // pred_region
          _
        $region20: #{tpu_custom_call.1} parent=11 // pred_fallthru
          _
        // Predicated region
        $region21: #{tpu_custom_call.1} parent=11 // pred_check
          %p411 = pneg %p145
        $region22: #{tpu_custom_call.1} parent=11 // pred_check_branch
          %413 = sbr.rel (%p411) target = $region24
        $region23: #{tpu_custom_call.1} parent=11 // pred_region
          _
        $region24: #{tpu_custom_call.1} parent=11 // pred_fallthru
          _
        // Predicated region
        $region25: #{tpu_custom_call.1} parent=11 // pred_check
          %p414 = pneg %p166
        $region26: #{tpu_custom_call.1} parent=11 // pred_check_branch
          %416 = sbr.rel (%p414) target = $region28
        $region27: #{tpu_custom_call.1} parent=11 // pred_region
          %418 = vsyncadd [#allocation6], 0
          %s419 = sshll.u32 %s5, 4
          %s420 = int_to_ptr.hbm [resolvable:$true] %s419
          %s421 = sshll.u32 [#allocation7], 4
          %s422 = int_to_ptr.vmem [resolvable:$true] %s421
          %427 = dma.hbm_to_vmem [thread:$0]  %s420, 256, %s422, [#allocation6], 64, 64, 4
        $region28: #{tpu_custom_call.1} parent=11 // pred_fallthru
          _
        // Predicated region
        $region29: #{tpu_custom_call.1} parent=11 // pred_check
          %p428 = pneg %p187
        $region30: #{tpu_custom_call.1} parent=11 // pred_check_branch
          %430 = sbr.rel (%p428) target = $region32
        $region31: #{tpu_custom_call.1} parent=11 // pred_region
          _
        $region32: #{tpu_custom_call.1} parent=11 // pred_fallthru
          _
        // Predicated region
        $region33: #{tpu_custom_call.1} parent=11 // pred_check
          %p431 = pneg %p208
        $region34: #{tpu_custom_call.1} parent=11 // pred_check_branch
          %433 = sbr.rel (%p431) target = $region36
        $region35: #{tpu_custom_call.1} parent=11 // pred_region
          %435 = vsyncadd [#allocation9], 0
          %s436 = sshll.u32 %s7, 4
          %s437 = int_to_ptr.hbm [resolvable:$true] %s436
          %s438 = sshll.u32 [#allocation8], 4
          %s439 = int_to_ptr.vmem [resolvable:$true] %s438
          %444 = dma.hbm_to_vmem [thread:$0]  %s437, 256, %s439, [#allocation9], 64, 64, 4
        $region36: #{tpu_custom_call.1} parent=11 // pred_fallthru
          _
        // Predicated region
        $region37: #{tpu_custom_call.1} parent=11 // pred_check
          %p445 = pneg %p229
        $region38: #{tpu_custom_call.1} parent=11 // pred_check_branch
          %447 = sbr.rel (%p445) target = $region40
        $region39: #{tpu_custom_call.1} parent=11 // pred_region
          _
        $region40: #{tpu_custom_call.1} parent=11 // pred_fallthru
          _
        // Predicated region
        $region41: #{tpu_custom_call.1} parent=11 // pred_check
          %p448 = pneg %p250
        $region42: #{tpu_custom_call.1} parent=11 // pred_check_branch
          %450 = sbr.rel (%p448) target = $region44
        $region43: #{tpu_custom_call.1} parent=11 // pred_region
          %452 = vsyncadd [#allocation9], 0
          %s453 = sshll.u32 %s9, 4
          %s454 = int_to_ptr.hbm [resolvable:$true] %s453
          %s455 = sshll.u32 [#allocation10], 4
          %s456 = int_to_ptr.vmem [resolvable:$true] %s455
          %461 = dma.hbm_to_vmem [thread:$0]  %s454, 256, %s456, [#allocation9], 64, 64, 4
        $region44: #{tpu_custom_call.1} parent=11 // pred_fallthru
          _
        // Predicated region
        $region45: #{tpu_custom_call.1} parent=11 // pred_check
          %p462 = pneg %p271
        $region46: #{tpu_custom_call.1} parent=11 // pred_check_branch
          %464 = sbr.rel (%p462) target = $region48
        $region47: #{tpu_custom_call.1} parent=11 // pred_region
          _
        $region48: #{tpu_custom_call.1} parent=11 // pred_fallthru
          _
        // Predicated region
        $region49: #{tpu_custom_call.1} parent=11 // pred_check
          %p465 = pneg %p292
        $region50: #{tpu_custom_call.1} parent=11 // pred_check_branch
          %467 = sbr.rel (%p465) target = $region52
        $region51: #{tpu_custom_call.1} parent=11 // pred_region
          _
        $region52: #{tpu_custom_call.1} parent=11 // pred_fallthru
          _
        // Predicated region
        $region53: #{tpu_custom_call.1} parent=11 // pred_check
          %p468 = pneg %p313
        $region54: #{tpu_custom_call.1} parent=11 // pred_check_branch
          %470 = sbr.rel (%p468) target = $region56
        $region55: #{tpu_custom_call.1} parent=11 // pred_region
          _
        $region56: #{tpu_custom_call.1} parent=11 // pred_fallthru
          _
        // Predicated region
        $region57: #{tpu_custom_call.1} parent=11 // pred_check
          %p471 = pneg %p334
        $region58: #{tpu_custom_call.1} parent=11 // pred_check_branch
          %473 = sbr.rel (%p471) target = $region60
        $region59: #{tpu_custom_call.1} parent=11 // pred_region
          %475 = vsyncadd [#allocation12], 0
          %s476 = sshll.u32 %s13, 4
          %s477 = int_to_ptr.hbm [resolvable:$true] %s476
          %s478 = sshll.u32 [#allocation11], 4
          %s479 = int_to_ptr.vmem [resolvable:$true] %s478
          %484 = dma.hbm_to_vmem [thread:$0]  %s477, 256, %s479, [#allocation12], 128, 128, 8
        $region60: #{tpu_custom_call.1} parent=11 // pred_fallthru
          _
        // Predicated region
        $region61: #{tpu_custom_call.1} parent=11 // pred_check
          %p485 = pneg %p355
        $region62: #{tpu_custom_call.1} parent=11 // pred_check_branch
          %487 = sbr.rel (%p485) target = $region64
        $region63: #{tpu_custom_call.1} parent=11 // pred_region
          _
        $region64: #{tpu_custom_call.1} parent=11 // pred_fallthru
          _
      $region12: #{tpu_custom_call.1} parent=5 // pred_fallthru
        _
      %p488 = scmp.lt.s32.totalorder %s30, 2
      // Predicated region
      $region65: #{tpu_custom_call.1} parent=5 // pred_check
        %p489 = pneg %p488
      $region66: #{tpu_custom_call.1} parent=5 // pred_check_branch
        %491 = sbr.rel (%p489) target = $region68
      $region67: #{tpu_custom_call.1} parent=5 // pred_region
        // Predicated region
        $region69: #{tpu_custom_call.1} parent=67 // pred_check
          %p492 = pneg %p50
        $region70: #{tpu_custom_call.1} parent=67 // pred_check_branch
          %494 = sbr.rel (%p492) target = $region72
        $region71: #{tpu_custom_call.1} parent=67 // pred_region
          %s495 = smul.u32 16, %s30
          %p496 = scmp.lt.s32.totalorder %s495, 31
          %s497 = scalar_select %p496, %s495, 31
          %s498 = smul.addr %s497, 4
          %s499 = scalar_lea.vmem %s0, %s498
          %s500 = smul.u32 16, %s30
        $region72: #{tpu_custom_call.1} parent=67 // pred_fallthru
          _
        // Predicated region
        $region73: #{tpu_custom_call.1} parent=67 // pred_check
          %p501 = pneg %p76
        $region74: #{tpu_custom_call.1} parent=67 // pred_check_branch
          %503 = sbr.rel (%p501) target = $region76
        $region75: #{tpu_custom_call.1} parent=67 // pred_region
          %s504 = sand.u32 %s66, 1
          %s505 = scalar_lea.sflag [#allocation3], %s504
          %s506 = sand.u32 %s66, 1
          %s507 = smul.addr %s506, 64
          %s508 = scalar_lea.vmem [#allocation2], %s507
          %s509 = smul.u32 16, %s30
          %511 = vsyncadd %s505, 0
          %s512 = smul.addr %s509, 4
          %s513 = scalar_lea.hbm %s1, %s512
          %s514 = sshll.u32 %s513, 4
          %s515 = int_to_ptr.hbm [resolvable:$true] %s514
          %s516 = sshll.u32 %s508, 4
          %s517 = int_to_ptr.vmem [resolvable:$true] %s516
          %522 = dma.hbm_to_vmem [thread:$0]  %s515, 1024, %s517, %s505, 64, 64, 4
        $region76: #{tpu_custom_call.1} parent=67 // pred_fallthru
          _
      $region68: #{tpu_custom_call.1} parent=5 // pred_fallthru
        _
      %p523 = scmp.le.s32.totalorder 1, %s30
      %p524 = scmp.lt.s32.totalorder %s30, 3
      %p525 = pnand %p523, %p524
      %p526 = pneg %p525
      // Predicated region
      $region77: #{tpu_custom_call.1} parent=5 // pred_check
        _
      $region78: #{tpu_custom_call.1} parent=5 // pred_check_branch
        %528 = sbr.rel (%p525) target = $region80
      $region79: #{tpu_custom_call.1} parent=5 // pred_region
        %s529 = ssub.s32 %s30, 1
        %s530 = sand.u32 %s69, 1
        %s531 = scalar_lea.sflag [#allocation3], %s530
        %s532 = sand.u32 %s69, 1
        %s533 = smul.addr %s532, 64
        %s534 = scalar_lea.vmem [#allocation2], %s533
        // Predicated region
        $region81: #{tpu_custom_call.1} parent=79 // pred_check
          %p535 = pneg %p82
        $region82: #{tpu_custom_call.1} parent=79 // pred_check_branch
          %537 = sbr.rel (%p535) target = $region84
        $region83: #{tpu_custom_call.1} parent=79 // pred_region
          %539 = dma.done %s531, 1024
        $region84: #{tpu_custom_call.1} parent=79 // pred_fallthru
          _
        // Predicated region
        $region85: #{tpu_custom_call.1} parent=79 // pred_check
          %p540 = pneg %p103
        $region86: #{tpu_custom_call.1} parent=79 // pred_check_branch
          %542 = sbr.rel (%p540) target = $region88
        $region87: #{tpu_custom_call.1} parent=79 // pred_region
          %544 = dma.done [#allocation6], 128
        $region88: #{tpu_custom_call.1} parent=79 // pred_fallthru
          _
        // Predicated region
        $region89: #{tpu_custom_call.1} parent=79 // pred_check
          %p545 = pneg %p166
        $region90: #{tpu_custom_call.1} parent=79 // pred_check_branch
          %547 = sbr.rel (%p545) target = $region92
        $region91: #{tpu_custom_call.1} parent=79 // pred_region
          %549 = dma.done [#allocation6], 256
        $region92: #{tpu_custom_call.1} parent=79 // pred_fallthru
          _
        // Predicated region
        $region93: #{tpu_custom_call.1} parent=79 // pred_check
          %p550 = pneg %p208
        $region94: #{tpu_custom_call.1} parent=79 // pred_check_branch
          %552 = sbr.rel (%p550) target = $region96
        $region95: #{tpu_custom_call.1} parent=79 // pred_region
          %554 = dma.done [#allocation9], 256
        $region96: #{tpu_custom_call.1} parent=79 // pred_fallthru
          _
        // Predicated region
        $region97: #{tpu_custom_call.1} parent=79 // pred_check
          %p555 = pneg %p250
        $region98: #{tpu_custom_call.1} parent=79 // pred_check_branch
          %557 = sbr.rel (%p555) target = $region100
        $region99: #{tpu_custom_call.1} parent=79 // pred_region
          %559 = dma.done [#allocation9], 256
        $region100: #{tpu_custom_call.1} parent=79 // pred_fallthru
          _
        // Predicated region
        $region101: #{tpu_custom_call.1} parent=79 // pred_check
          %p560 = pneg %p334
        $region102: #{tpu_custom_call.1} parent=79 // pred_check_branch
          %562 = sbr.rel (%p560) target = $region104
        $region103: #{tpu_custom_call.1} parent=79 // pred_region
          %564 = dma.done [#allocation12], 256
        $region104: #{tpu_custom_call.1} parent=79 // pred_fallthru
          _
        %s565 = smul.u32 16, %s35
        %p566 = scmp.lt.s32.totalorder %s565, 31
        %s567 = scalar_select %p566, %s565, 31
        %s568 = smul.addr %s567, 4
        %s569 = scalar_lea.vmem %s0, %s568
        %p570 = pneg %p56
        %p571 = pneg %p53
        %s572 = sand.u32 %s69, 1
        %s573 = scalar_lea.sflag [#allocation3], %s572
        %s574 = sand.u32 %s69, 1
        %s575 = smul.addr %s574, 64
        %s576 = scalar_lea.vmem [#allocation2], %s575
        %p577 = pneg %p82
        %p578 = pneg %p79
        %p579 = pneg %p103
        %p580 = pneg %p100
        %p581 = pneg %p124
        %p582 = pneg %p121
        %p583 = pneg %p145
        %p584 = pneg %p142
        %p585 = pneg %p166
        %p586 = pneg %p163
        %p587 = pneg %p187
        %p588 = pneg %p184
        %p589 = pneg %p208
        %p590 = pneg %p205
        %p591 = pneg %p229
        %p592 = pneg %p226
        %p593 = pneg %p250
        %p594 = pneg %p247
        %p595 = pneg %p271
        %p596 = pneg %p268
        %p597 = pneg %p292
        %p598 = pneg %p289
        %p599 = pneg %p313
        %p600 = pneg %p310
        %p601 = pneg %p334
        %p602 = pneg %p331
        %p603 = pneg %p355
        %p604 = pneg %p352
        %p605 = pneg %p381
        %p606 = pneg %p378
        %s607 = sand.u32 %s368, 1
        %s608 = scalar_lea.sflag [#allocation4], %s607
        %s609 = sand.u32 %s368, 1
        %s610 = smul.addr %s609, 8
        %s611 = scalar_lea.vmem [#allocation13], %s610
        %s612 = smul.u32 16, %s35
        %p613 = scmp.lt.s32.totalorder %s612, 31
        %s614 = scalar_select %p613, %s612, 31
        %s615 = smul.addr %s614, 4
        %s616 = scalar_lea.vmem %s0, %s615
        %s617 = smul.u32 16, %s35
        %s618 = smul.u32 16, %s35
        %v620 = vld [vmem:[%s616] sm:$0xf]
        %v621 = vld [vmem:[%s616 + $0x4] sm:$0xf]
        %v622 = vld [vmem:[%s616 + $0x8] sm:$0xf]
        %v623 = vld [vmem:[%s616 + $0xc] sm:$0xf]
        %v624 = vld [vmem:[%s616 + $0x10] sm:$0xf]
        %v625 = vld [vmem:[%s616 + $0x14] sm:$0xf]
        %v626 = vld [vmem:[%s616 + $0x18] sm:$0xf]
        %v627 = vld [vmem:[%s616 + $0x1c] sm:$0xf]
        %v628 = vld [vmem:[%s616 + $0x20] sm:$0xf]
        %v629 = vld [vmem:[%s616 + $0x24] sm:$0xf]
        %v630 = vld [vmem:[%s616 + $0x28] sm:$0xf]
        %v631 = vld [vmem:[%s616 + $0x2c] sm:$0xf]
        %v632 = vld [vmem:[%s616 + $0x30] sm:$0xf]
        %v633 = vld [vmem:[%s616 + $0x34] sm:$0xf]
        %v634 = vld [vmem:[%s616 + $0x38] sm:$0xf]
        %v635 = vld [vmem:[%s616 + $0x3c] sm:$0xf]
        %v636 = vld [vmem:[%s534] sm:$0xf]
        %v637 = vld [vmem:[%s534 + $0x4] sm:$0xf]
        %v638 = vld [vmem:[%s534 + $0x8] sm:$0xf]
        %v639 = vld [vmem:[%s534 + $0xc] sm:$0xf]
        %v640 = vld [vmem:[%s534 + $0x10] sm:$0xf]
        %v641 = vld [vmem:[%s534 + $0x14] sm:$0xf]
        %v642 = vld [vmem:[%s534 + $0x18] sm:$0xf]
        %v643 = vld [vmem:[%s534 + $0x1c] sm:$0xf]
        %v644 = vld [vmem:[%s534 + $0x20] sm:$0xf]
        %v645 = vld [vmem:[%s534 + $0x24] sm:$0xf]
        %v646 = vld [vmem:[%s534 + $0x28] sm:$0xf]
        %v647 = vld [vmem:[%s534 + $0x2c] sm:$0xf]
        %v648 = vld [vmem:[%s534 + $0x30] sm:$0xf]
        %v649 = vld [vmem:[%s534 + $0x34] sm:$0xf]
        %v650 = vld [vmem:[%s534 + $0x38] sm:$0xf]
        %v651 = vld [vmem:[%s534 + $0x3c] sm:$0xf]
        %v652 = vld [vmem:[%s3] sm:$0xf]
        %v653 = vld [vmem:[%s3 + $0x4] sm:$0xf]
        %v654 = vld [vmem:[%s3 + $0x8] sm:$0xf]
        %v655 = vld [vmem:[%s3 + $0xc] sm:$0xf]
        %v656 = vld [vmem:[%s3 + $0x10] sm:$0xf]
        %v657 = vld [vmem:[%s3 + $0x14] sm:$0xf]
        %v658 = vld [vmem:[%s3 + $0x18] sm:$0xf]
        %v659 = vld [vmem:[%s3 + $0x1c] sm:$0xf]
        %v660 = vld [vmem:[%s3 + $0x20] sm:$0xf]
        %v661 = vld [vmem:[%s3 + $0x24] sm:$0xf]
        %v662 = vld [vmem:[%s3 + $0x28] sm:$0xf]
        %v663 = vld [vmem:[%s3 + $0x2c] sm:$0xf]
        %v664 = vld [vmem:[%s3 + $0x30] sm:$0xf]
        %v665 = vld [vmem:[%s3 + $0x34] sm:$0xf]
        %v666 = vld [vmem:[%s3 + $0x38] sm:$0xf]
        %v667 = vld [vmem:[%s3 + $0x3c] sm:$0xf]
        %v668 = vld [vmem:[%s4] sm:$0x1]
        %v685 = vunpack.c.l.b16 %v636
        %v686 = vunpack.c.l.b16 %v637
        %v687 = vunpack.c.l.b16 %v638
        %v688 = vunpack.c.l.b16 %v639
        %v689 = vunpack.c.l.b16 %v640
        %v690 = vunpack.c.l.b16 %v641
        %v691 = vunpack.c.l.b16 %v642
        %v692 = vunpack.c.l.b16 %v643
        %v693 = vunpack.c.l.b16 %v644
        %v694 = vunpack.c.l.b16 %v645
        %v695 = vunpack.c.l.b16 %v646
        %v696 = vunpack.c.l.b16 %v647
        %v697 = vunpack.c.l.b16 %v648
        %v698 = vunpack.c.l.b16 %v649
        %v699 = vunpack.c.l.b16 %v650
        %v700 = vunpack.c.l.b16 %v651
        %v701 = vpack.c.b16 %v686, %v685
        %v702 = vpack.c.b16 %v688, %v687
        %v703 = vpack.c.b16 %v690, %v689
        %v704 = vpack.c.b16 %v692, %v691
        %v705 = vpack.c.b16 %v694, %v693
        %v706 = vpack.c.b16 %v696, %v695
        %v707 = vpack.c.b16 %v698, %v697
        %v708 = vpack.c.b16 %v700, %v699
        %v733 = vunpack.c.l.b16 %v652
        %v734 = vunpack.c.l.b16 %v653
        %v735 = vunpack.c.l.b16 %v654
        %v736 = vunpack.c.l.b16 %v655
        %v737 = vunpack.c.l.b16 %v656
        %v738 = vunpack.c.l.b16 %v657
        %v739 = vunpack.c.l.b16 %v658
        %v740 = vunpack.c.l.b16 %v659
        %v741 = vunpack.c.l.b16 %v660
        %v742 = vunpack.c.l.b16 %v661
        %v743 = vunpack.c.l.b16 %v662
        %v744 = vunpack.c.l.b16 %v663
        %v745 = vunpack.c.l.b16 %v664
        %v746 = vunpack.c.l.b16 %v665
        %v747 = vunpack.c.l.b16 %v666
        %v748 = vunpack.c.l.b16 %v667
        %v749 = vpack.c.b16 %v734, %v733
        %v750 = vpack.c.b16 %v736, %v735
        %v751 = vpack.c.b16 %v738, %v737
        %v752 = vpack.c.b16 %v740, %v739
        %v753 = vpack.c.b16 %v742, %v741
        %v754 = vpack.c.b16 %v744, %v743
        %v755 = vpack.c.b16 %v746, %v745
        %v756 = vpack.c.b16 %v748, %v747
        %765 = vmatpush.bf16.msra.mxu0 %v756
        %766 = vmatpush.bf16.msra.mxu0 %v755
        %767 = vmatpush.bf16.msra.mxu0 %v754
        %768 = vmatpush.bf16.msra.mxu0 %v753
        %769 = vmatpush.bf16.msra.mxu0 %v752
        %770 = vmatpush.bf16.msra.mxu0 %v751
        %771 = vmatpush.bf16.msra.mxu0 %v750
        %772 = vmatpush.bf16.msra.mxu0 %v749
        %773 = vmatmul.bf16.gmra.mxu0 %v701
        %v774 = vpop.f32.mrf.mxu0
        %v775 = vadd.f32 0.0, %v774
        %v776 = vpop.f32.mrf.mxu0
        %v777 = vadd.f32 0.0, %v776
        %778 = vmatmul.bf16.gmra.mxu0 %v702
        %v779 = vpop.f32.mrf.mxu0
        %v780 = vadd.f32 0.0, %v779
        %v781 = vpop.f32.mrf.mxu0
        %v782 = vadd.f32 0.0, %v781
        %783 = vmatmul.bf16.gmra.mxu0 %v703
        %v784 = vpop.f32.mrf.mxu0
        %v785 = vadd.f32 0.0, %v784
        %v786 = vpop.f32.mrf.mxu0
        %v787 = vadd.f32 0.0, %v786
        %788 = vmatmul.bf16.gmra.mxu0 %v704
        %v789 = vpop.f32.mrf.mxu0
        %v790 = vadd.f32 0.0, %v789
        %v791 = vpop.f32.mrf.mxu0
        %v792 = vadd.f32 0.0, %v791
        %793 = vmatmul.bf16.gmra.mxu0 %v705
        %v794 = vpop.f32.mrf.mxu0
        %v795 = vadd.f32 0.0, %v794
        %v796 = vpop.f32.mrf.mxu0
        %v797 = vadd.f32 0.0, %v796
        %798 = vmatmul.bf16.gmra.mxu0 %v706
        %v799 = vpop.f32.mrf.mxu0
        %v800 = vadd.f32 0.0, %v799
        %v801 = vpop.f32.mrf.mxu0
        %v802 = vadd.f32 0.0, %v801
        %803 = vmatmul.bf16.gmra.mxu0 %v707
        %v804 = vpop.f32.mrf.mxu0
        %v805 = vadd.f32 0.0, %v804
        %v806 = vpop.f32.mrf.mxu0
        %v807 = vadd.f32 0.0, %v806
        %808 = vmatmul.bf16.gmra.mxu0 %v708
        %v809 = vpop.f32.mrf.mxu0
        %v810 = vadd.f32 0.0, %v809
        %v811 = vpop.f32.mrf.mxu0
        %v812 = vadd.f32 0.0, %v811
        %813 = vdwg.mxu0
        %v814 = vpack.c.bf16 %v777, %v775
        %v815 = vpack.c.bf16 %v782, %v780
        %v816 = vpack.c.bf16 %v787, %v785
        %v817 = vpack.c.bf16 %v792, %v790
        %v818 = vpack.c.bf16 %v797, %v795
        %v819 = vpack.c.bf16 %v802, %v800
        %v820 = vpack.c.bf16 %v807, %v805
        %v821 = vpack.c.bf16 %v812, %v810
        %v823 = vperm.slane %v668, 0
        %v841 = vunpack.c.l.b16 %v620
        %v842 = vunpack.c.l.b16 %v621
        %v843 = vunpack.c.l.b16 %v622
        %v844 = vunpack.c.l.b16 %v623
        %v845 = vunpack.c.l.b16 %v624
        %v846 = vunpack.c.l.b16 %v625
        %v847 = vunpack.c.l.b16 %v626
        %v848 = vunpack.c.l.b16 %v627
        %v849 = vunpack.c.l.b16 %v628
        %v850 = vunpack.c.l.b16 %v629
        %v851 = vunpack.c.l.b16 %v630
        %v852 = vunpack.c.l.b16 %v631
        %v853 = vunpack.c.l.b16 %v632
        %v854 = vunpack.c.l.b16 %v633
        %v855 = vunpack.c.l.b16 %v634
        %v856 = vunpack.c.l.b16 %v635
        %v857 = vpack.c.b16 %v842, %v841
        %v858 = vpack.c.b16 %v844, %v843
        %v859 = vpack.c.b16 %v846, %v845
        %v860 = vpack.c.b16 %v848, %v847
        %v861 = vpack.c.b16 %v850, %v849
        %v862 = vpack.c.b16 %v852, %v851
        %v863 = vpack.c.b16 %v854, %v853
        %v864 = vpack.c.b16 %v856, %v855
        %873 = vmatpush.bf16.msra.mxu0 %v821
        %874 = vmatpush.bf16.msra.mxu0 %v820
        %875 = vmatpush.bf16.msra.mxu0 %v819
        %876 = vmatpush.bf16.msra.mxu0 %v818
        %877 = vmatpush.bf16.msra.mxu0 %v817
        %878 = vmatpush.bf16.msra.mxu0 %v816
        %879 = vmatpush.bf16.msra.mxu0 %v815
        %880 = vmatpush.bf16.msra.mxu0 %v814
        %881 = vmatmul.bf16.gmra.mxu0 %v857
        %v882 = vpop.f32.mrf.mxu0
        %v883 = vadd.f32 %v823, %v882
        %v884 = vpop.f32.mrf.mxu0
        %v885 = vadd.f32 %v823, %v884
        %886 = vmatmul.bf16.gmra.mxu0 %v858
        %v887 = vpop.f32.mrf.mxu0
        %v888 = vadd.f32 %v823, %v887
        %v889 = vpop.f32.mrf.mxu0
        %v890 = vadd.f32 %v823, %v889
        %891 = vmatmul.bf16.gmra.mxu0 %v859
        %v892 = vpop.f32.mrf.mxu0
        %v893 = vadd.f32 %v823, %v892
        %v894 = vpop.f32.mrf.mxu0
        %v895 = vadd.f32 %v823, %v894
        %896 = vmatmul.bf16.gmra.mxu0 %v860
        %v897 = vpop.f32.mrf.mxu0
        %v898 = vadd.f32 %v823, %v897
        %v899 = vpop.f32.mrf.mxu0
        %v900 = vadd.f32 %v823, %v899
        %901 = vmatmul.bf16.gmra.mxu0 %v861
        %v902 = vpop.f32.mrf.mxu0
        %v903 = vadd.f32 %v823, %v902
        %v904 = vpop.f32.mrf.mxu0
        %v905 = vadd.f32 %v823, %v904
        %906 = vmatmul.bf16.gmra.mxu0 %v862
        %v907 = vpop.f32.mrf.mxu0
        %v908 = vadd.f32 %v823, %v907
        %v909 = vpop.f32.mrf.mxu0
        %v910 = vadd.f32 %v823, %v909
        %911 = vmatmul.bf16.gmra.mxu0 %v863
        %v912 = vpop.f32.mrf.mxu0
        %v913 = vadd.f32 %v823, %v912
        %v914 = vpop.f32.mrf.mxu0
        %v915 = vadd.f32 %v823, %v914
        %916 = vmatmul.bf16.gmra.mxu0 %v864
        %v917 = vpop.f32.mrf.mxu0
        %v918 = vadd.f32 %v823, %v917
        %v919 = vpop.f32.mrf.mxu0
        %v920 = vadd.f32 %v823, %v919
        %921 = vdwg.mxu0
        %v922 = vmax.f32 %v883, 0.0
        %v923 = vmax.f32 %v885, 0.0
        %v924 = vmax.f32 %v888, 0.0
        %v925 = vmax.f32 %v890, 0.0
        %v926 = vmax.f32 %v893, 0.0
        %v927 = vmax.f32 %v895, 0.0
        %v928 = vmax.f32 %v898, 0.0
        %v929 = vmax.f32 %v900, 0.0
        %v930 = vmax.f32 %v903, 0.0
        %v931 = vmax.f32 %v905, 0.0
        %v932 = vmax.f32 %v908, 0.0
        %v933 = vmax.f32 %v910, 0.0
        %v934 = vmax.f32 %v913, 0.0
        %v935 = vmax.f32 %v915, 0.0
        %v936 = vmax.f32 %v918, 0.0
        %v937 = vmax.f32 %v920, 0.0
        %v938 = vld [vmem:[#allocation7] sm:$0xf]
        %v939 = vld [vmem:[#allocation7 + $0x4] sm:$0xf]
        %v940 = vld [vmem:[#allocation7 + $0x8] sm:$0xf]
        %v941 = vld [vmem:[#allocation7 + $0xc] sm:$0xf]
        %v942 = vld [vmem:[%s6] sm:$0x1]
        %v943 = vpack.c.bf16 %v923, %v922
        %v944 = vpack.c.bf16 %v925, %v924
        %v945 = vpack.c.bf16 %v927, %v926
        %v946 = vpack.c.bf16 %v929, %v928
        %v947 = vpack.c.bf16 %v931, %v930
        %v948 = vpack.c.bf16 %v933, %v932
        %v949 = vpack.c.bf16 %v935, %v934
        %v950 = vpack.c.bf16 %v937, %v936
        %v955 = vunpack.c.l.b16 %v938
        %v956 = vunpack.c.l.b16 %v939
        %v957 = vunpack.c.l.b16 %v940
        %v958 = vunpack.c.l.b16 %v941
        %v959 = vpack.c.b16 %v956, %v955
        %v960 = vpack.c.b16 %v958, %v957
        %vm963 = vcmask 261120
        %v965 = vsel %vm963, %v943, 0
        %v968 = vsel %vm963, %v944, 0
        %v971 = vsel %vm963, %v945, 0
        %v974 = vsel %vm963, %v946, 0
        %v977 = vsel %vm963, %v947, 0
        %v980 = vsel %vm963, %v948, 0
        %v983 = vsel %vm963, %v949, 0
        %v986 = vsel %vm963, %v950, 0
        %988 = vmatpush.bf16.msra.mxu0 0
        %989 = vmatpush.bf16.msra.mxu0 0
        %990 = vmatpush.bf16.msra.mxu0 0
        %991 = vmatpush.bf16.msra.mxu0 0
        %992 = vmatpush.bf16.msra.mxu0 0
        %993 = vmatpush.bf16.msra.mxu0 0
        %994 = vmatpush.bf16.msra.mxu0 %v960
        %995 = vmatpush.bf16.msra.mxu0 %v959
        %996 = vmatmul.bf16.gmra.mxu0 %v965
        %v997 = vpop.f32.mrf.mxu0
        %v998 = vadd.f32 0.0, %v997
        %v999 = vpop.f32.mrf.mxu0
        %v1000 = vadd.f32 0.0, %v999
        %1001 = vmatmul.bf16.gmra.mxu0 %v968
        %v1002 = vpop.f32.mrf.mxu0
        %v1003 = vadd.f32 0.0, %v1002
        %v1004 = vpop.f32.mrf.mxu0
        %v1005 = vadd.f32 0.0, %v1004
        %1006 = vmatmul.bf16.gmra.mxu0 %v971
        %v1007 = vpop.f32.mrf.mxu0
        %v1008 = vadd.f32 0.0, %v1007
        %v1009 = vpop.f32.mrf.mxu0
        %v1010 = vadd.f32 0.0, %v1009
        %1011 = vmatmul.bf16.gmra.mxu0 %v974
        %v1012 = vpop.f32.mrf.mxu0
        %v1013 = vadd.f32 0.0, %v1012
        %v1014 = vpop.f32.mrf.mxu0
        %v1015 = vadd.f32 0.0, %v1014
        %1016 = vmatmul.bf16.gmra.mxu0 %v977
        %v1017 = vpop.f32.mrf.mxu0
        %v1018 = vadd.f32 0.0, %v1017
        %v1019 = vpop.f32.mrf.mxu0
        %v1020 = vadd.f32 0.0, %v1019
        %1021 = vmatmul.bf16.gmra.mxu0 %v980
        %v1022 = vpop.f32.mrf.mxu0
        %v1023 = vadd.f32 0.0, %v1022
        %v1024 = vpop.f32.mrf.mxu0
        %v1025 = vadd.f32 0.0, %v1024
        %1026 = vmatmul.bf16.gmra.mxu0 %v983
        %v1027 = vpop.f32.mrf.mxu0
        %v1028 = vadd.f32 0.0, %v1027
        %v1029 = vpop.f32.mrf.mxu0
        %v1030 = vadd.f32 0.0, %v1029
        %1031 = vmatmul.bf16.gmra.mxu0 %v986
        %v1032 = vpop.f32.mrf.mxu0
        %v1033 = vadd.f32 0.0, %v1032
        %v1034 = vpop.f32.mrf.mxu0
        %v1035 = vadd.f32 0.0, %v1034
        %1036 = vdwg.mxu0
        %v1037 = vpack.c.bf16 %v1000, %v998
        %v1038 = vpack.c.bf16 %v1005, %v1003
        %v1039 = vpack.c.bf16 %v1010, %v1008
        %v1040 = vpack.c.bf16 %v1015, %v1013
        %v1041 = vpack.c.bf16 %v1020, %v1018
        %v1042 = vpack.c.bf16 %v1025, %v1023
        %v1043 = vpack.c.bf16 %v1030, %v1028
        %v1044 = vpack.c.bf16 %v1035, %v1033
        %v1046 = vperm.slane %v942, 0
        %1048 = vmatpush.bf16.msra.mxu0 %v1044
        %1049 = vmatpush.bf16.msra.mxu0 %v1043
        %1050 = vmatpush.bf16.msra.mxu0 %v1042
        %1051 = vmatpush.bf16.msra.mxu0 %v1041
        %1052 = vmatpush.bf16.msra.mxu0 %v1040
        %1053 = vmatpush.bf16.msra.mxu0 %v1039
        %1054 = vmatpush.bf16.msra.mxu0 %v1038
        %1055 = vmatpush.bf16.msra.mxu0 %v1037
        %1056 = vmatmul.bf16.gmra.mxu0 %v857
        %v1057 = vpop.f32.mrf.mxu0
        %v1058 = vadd.f32 %v1046, %v1057
        %v1059 = vpop.f32.mrf.mxu0
        %v1060 = vadd.f32 %v1046, %v1059
        %1061 = vmatmul.bf16.gmra.mxu0 %v858
        %v1062 = vpop.f32.mrf.mxu0
        %v1063 = vadd.f32 %v1046, %v1062
        %v1064 = vpop.f32.mrf.mxu0
        %v1065 = vadd.f32 %v1046, %v1064
        %1066 = vmatmul.bf16.gmra.mxu0 %v859
        %v1067 = vpop.f32.mrf.mxu0
        %v1068 = vadd.f32 %v1046, %v1067
        %v1069 = vpop.f32.mrf.mxu0
        %v1070 = vadd.f32 %v1046, %v1069
        %1071 = vmatmul.bf16.gmra.mxu0 %v860
        %v1072 = vpop.f32.mrf.mxu0
        %v1073 = vadd.f32 %v1046, %v1072
        %v1074 = vpop.f32.mrf.mxu0
        %v1075 = vadd.f32 %v1046, %v1074
        %1076 = vmatmul.bf16.gmra.mxu0 %v861
        %v1077 = vpop.f32.mrf.mxu0
        %v1078 = vadd.f32 %v1046, %v1077
        %v1079 = vpop.f32.mrf.mxu0
        %v1080 = vadd.f32 %v1046, %v1079
        %1081 = vmatmul.bf16.gmra.mxu0 %v862
        %v1082 = vpop.f32.mrf.mxu0
        %v1083 = vadd.f32 %v1046, %v1082
        %v1084 = vpop.f32.mrf.mxu0
        %v1085 = vadd.f32 %v1046, %v1084
        %1086 = vmatmul.bf16.gmra.mxu0 %v863
        %v1087 = vpop.f32.mrf.mxu0
        %v1088 = vadd.f32 %v1046, %v1087
        %v1089 = vpop.f32.mrf.mxu0
        %v1090 = vadd.f32 %v1046, %v1089
        %1091 = vmatmul.bf16.gmra.mxu0 %v864
        %v1092 = vpop.f32.mrf.mxu0
        %v1093 = vadd.f32 %v1046, %v1092
        %v1094 = vpop.f32.mrf.mxu0
        %v1095 = vadd.f32 %v1046, %v1094
        %1096 = vdwg.mxu0
        %v1097 = vmax.f32 %v1058, 0.0
        %v1098 = vmax.f32 %v1060, 0.0
        %v1099 = vmax.f32 %v1063, 0.0
        %v1100 = vmax.f32 %v1065, 0.0
        %v1101 = vmax.f32 %v1068, 0.0
        %v1102 = vmax.f32 %v1070, 0.0
        %v1103 = vmax.f32 %v1073, 0.0
        %v1104 = vmax.f32 %v1075, 0.0
        %v1105 = vmax.f32 %v1078, 0.0
        %v1106 = vmax.f32 %v1080, 0.0
        %v1107 = vmax.f32 %v1083, 0.0
        %v1108 = vmax.f32 %v1085, 0.0
        %v1109 = vmax.f32 %v1088, 0.0
        %v1110 = vmax.f32 %v1090, 0.0
        %v1111 = vmax.f32 %v1093, 0.0
        %v1112 = vmax.f32 %v1095, 0.0
        %v1113 = vld [vmem:[#allocation8] sm:$0xf]
        %v1114 = vld [vmem:[#allocation8 + $0x4] sm:$0xf]
        %v1115 = vld [vmem:[#allocation8 + $0x8] sm:$0xf]
        %v1116 = vld [vmem:[#allocation8 + $0xc] sm:$0xf]
        %v1117 = vld [vmem:[%s8] sm:$0x1]
        %v1118 = vpack.c.bf16 %v1098, %v1097
        %v1119 = vpack.c.bf16 %v1100, %v1099
        %v1120 = vpack.c.bf16 %v1102, %v1101
        %v1121 = vpack.c.bf16 %v1104, %v1103
        %v1122 = vpack.c.bf16 %v1106, %v1105
        %v1123 = vpack.c.bf16 %v1108, %v1107
        %v1124 = vpack.c.bf16 %v1110, %v1109
        %v1125 = vpack.c.bf16 %v1112, %v1111
        %v1130 = vunpack.c.l.b16 %v1113
        %v1131 = vunpack.c.l.b16 %v1114
        %v1132 = vunpack.c.l.b16 %v1115
        %v1133 = vunpack.c.l.b16 %v1116
        %v1134 = vpack.c.b16 %v1131, %v1130
        %v1135 = vpack.c.b16 %v1133, %v1132
        %v1139 = vsel %vm963, %v1118, 0
        %v1142 = vsel %vm963, %v1119, 0
        %v1145 = vsel %vm963, %v1120, 0
        %v1148 = vsel %vm963, %v1121, 0
        %v1151 = vsel %vm963, %v1122, 0
        %v1154 = vsel %vm963, %v1123, 0
        %v1157 = vsel %vm963, %v1124, 0
        %v1160 = vsel %vm963, %v1125, 0
        %1162 = vmatpush.bf16.msra.mxu0 0
        %1163 = vmatpush.bf16.msra.mxu0 0
        %1164 = vmatpush.bf16.msra.mxu0 0
        %1165 = vmatpush.bf16.msra.mxu0 0
        %1166 = vmatpush.bf16.msra.mxu0 0
        %1167 = vmatpush.bf16.msra.mxu0 0
        %1168 = vmatpush.bf16.msra.mxu0 %v1135
        %1169 = vmatpush.bf16.msra.mxu0 %v1134
        %1170 = vmatmul.bf16.gmra.mxu0 %v1139
        %v1171 = vpop.f32.mrf.mxu0
        %v1172 = vadd.f32 0.0, %v1171
        %v1173 = vpop.f32.mrf.mxu0
        %v1174 = vadd.f32 0.0, %v1173
        %1175 = vmatmul.bf16.gmra.mxu0 %v1142
        %v1176 = vpop.f32.mrf.mxu0
        %v1177 = vadd.f32 0.0, %v1176
        %v1178 = vpop.f32.mrf.mxu0
        %v1179 = vadd.f32 0.0, %v1178
        %1180 = vmatmul.bf16.gmra.mxu0 %v1145
        %v1181 = vpop.f32.mrf.mxu0
        %v1182 = vadd.f32 0.0, %v1181
        %v1183 = vpop.f32.mrf.mxu0
        %v1184 = vadd.f32 0.0, %v1183
        %1185 = vmatmul.bf16.gmra.mxu0 %v1148
        %v1186 = vpop.f32.mrf.mxu0
        %v1187 = vadd.f32 0.0, %v1186
        %v1188 = vpop.f32.mrf.mxu0
        %v1189 = vadd.f32 0.0, %v1188
        %1190 = vmatmul.bf16.gmra.mxu0 %v1151
        %v1191 = vpop.f32.mrf.mxu0
        %v1192 = vadd.f32 0.0, %v1191
        %v1193 = vpop.f32.mrf.mxu0
        %v1194 = vadd.f32 0.0, %v1193
        %1195 = vmatmul.bf16.gmra.mxu0 %v1154
        %v1196 = vpop.f32.mrf.mxu0
        %v1197 = vadd.f32 0.0, %v1196
        %v1198 = vpop.f32.mrf.mxu0
        %v1199 = vadd.f32 0.0, %v1198
        %1200 = vmatmul.bf16.gmra.mxu0 %v1157
        %v1201 = vpop.f32.mrf.mxu0
        %v1202 = vadd.f32 0.0, %v1201
        %v1203 = vpop.f32.mrf.mxu0
        %v1204 = vadd.f32 0.0, %v1203
        %1205 = vmatmul.bf16.gmra.mxu0 %v1160
        %v1206 = vpop.f32.mrf.mxu0
        %v1207 = vadd.f32 0.0, %v1206
        %v1208 = vpop.f32.mrf.mxu0
        %v1209 = vadd.f32 0.0, %v1208
        %1210 = vdwg.mxu0
        %v1211 = vpack.c.bf16 %v1174, %v1172
        %v1212 = vpack.c.bf16 %v1179, %v1177
        %v1213 = vpack.c.bf16 %v1184, %v1182
        %v1214 = vpack.c.bf16 %v1189, %v1187
        %v1215 = vpack.c.bf16 %v1194, %v1192
        %v1216 = vpack.c.bf16 %v1199, %v1197
        %v1217 = vpack.c.bf16 %v1204, %v1202
        %v1218 = vpack.c.bf16 %v1209, %v1207
        %v1220 = vperm.slane %v1117, 0
        %1222 = vmatpush.bf16.msra.mxu0 %v1218
        %1223 = vmatpush.bf16.msra.mxu0 %v1217
        %1224 = vmatpush.bf16.msra.mxu0 %v1216
        %1225 = vmatpush.bf16.msra.mxu0 %v1215
        %1226 = vmatpush.bf16.msra.mxu0 %v1214
        %1227 = vmatpush.bf16.msra.mxu0 %v1213
        %1228 = vmatpush.bf16.msra.mxu0 %v1212
        %1229 = vmatpush.bf16.msra.mxu0 %v1211
        %1230 = vmatmul.bf16.gmra.mxu0 %v857
        %v1231 = vpop.f32.mrf.mxu0
        %v1232 = vadd.f32 %v1220, %v1231
        %v1233 = vpop.f32.mrf.mxu0
        %v1234 = vadd.f32 %v1220, %v1233
        %1235 = vmatmul.bf16.gmra.mxu0 %v858
        %v1236 = vpop.f32.mrf.mxu0
        %v1237 = vadd.f32 %v1220, %v1236
        %v1238 = vpop.f32.mrf.mxu0
        %v1239 = vadd.f32 %v1220, %v1238
        %1240 = vmatmul.bf16.gmra.mxu0 %v859
        %v1241 = vpop.f32.mrf.mxu0
        %v1242 = vadd.f32 %v1220, %v1241
        %v1243 = vpop.f32.mrf.mxu0
        %v1244 = vadd.f32 %v1220, %v1243
        %1245 = vmatmul.bf16.gmra.mxu0 %v860
        %v1246 = vpop.f32.mrf.mxu0
        %v1247 = vadd.f32 %v1220, %v1246
        %v1248 = vpop.f32.mrf.mxu0
        %v1249 = vadd.f32 %v1220, %v1248
        %1250 = vmatmul.bf16.gmra.mxu0 %v861
        %v1251 = vpop.f32.mrf.mxu0
        %v1252 = vadd.f32 %v1220, %v1251
        %v1253 = vpop.f32.mrf.mxu0
        %v1254 = vadd.f32 %v1220, %v1253
        %1255 = vmatmul.bf16.gmra.mxu0 %v862
        %v1256 = vpop.f32.mrf.mxu0
        %v1257 = vadd.f32 %v1220, %v1256
        %v1258 = vpop.f32.mrf.mxu0
        %v1259 = vadd.f32 %v1220, %v1258
        %1260 = vmatmul.bf16.gmra.mxu0 %v863
        %v1261 = vpop.f32.mrf.mxu0
        %v1262 = vadd.f32 %v1220, %v1261
        %v1263 = vpop.f32.mrf.mxu0
        %v1264 = vadd.f32 %v1220, %v1263
        %1265 = vmatmul.bf16.gmra.mxu0 %v864
        %v1266 = vpop.f32.mrf.mxu0
        %v1267 = vadd.f32 %v1220, %v1266
        %v1268 = vpop.f32.mrf.mxu0
        %v1269 = vadd.f32 %v1220, %v1268
        %1270 = vdwg.mxu0
        %v1271 = vmax.f32 %v1232, 0.0
        %v1272 = vmax.f32 %v1234, 0.0
        %v1273 = vmax.f32 %v1237, 0.0
        %v1274 = vmax.f32 %v1239, 0.0
        %v1275 = vmax.f32 %v1242, 0.0
        %v1276 = vmax.f32 %v1244, 0.0
        %v1277 = vmax.f32 %v1247, 0.0
        %v1278 = vmax.f32 %v1249, 0.0
        %v1279 = vmax.f32 %v1252, 0.0
        %v1280 = vmax.f32 %v1254, 0.0
        %v1281 = vmax.f32 %v1257, 0.0
        %v1282 = vmax.f32 %v1259, 0.0
        %v1283 = vmax.f32 %v1262, 0.0
        %v1284 = vmax.f32 %v1264, 0.0
        %v1285 = vmax.f32 %v1267, 0.0
        %v1286 = vmax.f32 %v1269, 0.0
        %v1287 = vld [vmem:[#allocation10] sm:$0xf]
        %v1288 = vld [vmem:[#allocation10 + $0x4] sm:$0xf]
        %v1289 = vld [vmem:[#allocation10 + $0x8] sm:$0xf]
        %v1290 = vld [vmem:[#allocation10 + $0xc] sm:$0xf]
        %v1291 = vld [vmem:[%s10] sm:$0x1]
        %v1292 = vpack.c.bf16 %v1272, %v1271
        %v1293 = vpack.c.bf16 %v1274, %v1273
        %v1294 = vpack.c.bf16 %v1276, %v1275
        %v1295 = vpack.c.bf16 %v1278, %v1277
        %v1296 = vpack.c.bf16 %v1280, %v1279
        %v1297 = vpack.c.bf16 %v1282, %v1281
        %v1298 = vpack.c.bf16 %v1284, %v1283
        %v1299 = vpack.c.bf16 %v1286, %v1285
        %v1304 = vunpack.c.l.b16 %v1287
        %v1305 = vunpack.c.l.b16 %v1288
        %v1306 = vunpack.c.l.b16 %v1289
        %v1307 = vunpack.c.l.b16 %v1290
        %v1308 = vpack.c.b16 %v1305, %v1304
        %v1309 = vpack.c.b16 %v1307, %v1306
        %v1313 = vsel %vm963, %v1292, 0
        %v1316 = vsel %vm963, %v1293, 0
        %v1319 = vsel %vm963, %v1294, 0
        %v1322 = vsel %vm963, %v1295, 0
        %v1325 = vsel %vm963, %v1296, 0
        %v1328 = vsel %vm963, %v1297, 0
        %v1331 = vsel %vm963, %v1298, 0
        %v1334 = vsel %vm963, %v1299, 0
        %1336 = vmatpush.bf16.msra.mxu0 0
        %1337 = vmatpush.bf16.msra.mxu0 0
        %1338 = vmatpush.bf16.msra.mxu0 0
        %1339 = vmatpush.bf16.msra.mxu0 0
        %1340 = vmatpush.bf16.msra.mxu0 0
        %1341 = vmatpush.bf16.msra.mxu0 0
        %1342 = vmatpush.bf16.msra.mxu0 %v1309
        %1343 = vmatpush.bf16.msra.mxu0 %v1308
        %1344 = vmatmul.bf16.gmra.mxu0 %v1313
        %v1345 = vpop.f32.mrf.mxu0
        %v1346 = vadd.f32 0.0, %v1345
        %v1347 = vpop.f32.mrf.mxu0
        %v1348 = vadd.f32 0.0, %v1347
        %1349 = vmatmul.bf16.gmra.mxu0 %v1316
        %v1350 = vpop.f32.mrf.mxu0
        %v1351 = vadd.f32 0.0, %v1350
        %v1352 = vpop.f32.mrf.mxu0
        %v1353 = vadd.f32 0.0, %v1352
        %1354 = vmatmul.bf16.gmra.mxu0 %v1319
        %v1355 = vpop.f32.mrf.mxu0
        %v1356 = vadd.f32 0.0, %v1355
        %v1357 = vpop.f32.mrf.mxu0
        %v1358 = vadd.f32 0.0, %v1357
        %1359 = vmatmul.bf16.gmra.mxu0 %v1322
        %v1360 = vpop.f32.mrf.mxu0
        %v1361 = vadd.f32 0.0, %v1360
        %v1362 = vpop.f32.mrf.mxu0
        %v1363 = vadd.f32 0.0, %v1362
        %1364 = vmatmul.bf16.gmra.mxu0 %v1325
        %v1365 = vpop.f32.mrf.mxu0
        %v1366 = vadd.f32 0.0, %v1365
        %v1367 = vpop.f32.mrf.mxu0
        %v1368 = vadd.f32 0.0, %v1367
        %1369 = vmatmul.bf16.gmra.mxu0 %v1328
        %v1370 = vpop.f32.mrf.mxu0
        %v1371 = vadd.f32 0.0, %v1370
        %v1372 = vpop.f32.mrf.mxu0
        %v1373 = vadd.f32 0.0, %v1372
        %1374 = vmatmul.bf16.gmra.mxu0 %v1331
        %v1375 = vpop.f32.mrf.mxu0
        %v1376 = vadd.f32 0.0, %v1375
        %v1377 = vpop.f32.mrf.mxu0
        %v1378 = vadd.f32 0.0, %v1377
        %1379 = vmatmul.bf16.gmra.mxu0 %v1334
        %v1380 = vpop.f32.mrf.mxu0
        %v1381 = vadd.f32 0.0, %v1380
        %v1382 = vpop.f32.mrf.mxu0
        %v1383 = vadd.f32 0.0, %v1382
        %1384 = vdwg.mxu0
        %v1385 = vpack.c.bf16 %v1348, %v1346
        %v1386 = vpack.c.bf16 %v1353, %v1351
        %v1387 = vpack.c.bf16 %v1358, %v1356
        %v1388 = vpack.c.bf16 %v1363, %v1361
        %v1389 = vpack.c.bf16 %v1368, %v1366
        %v1390 = vpack.c.bf16 %v1373, %v1371
        %v1391 = vpack.c.bf16 %v1378, %v1376
        %v1392 = vpack.c.bf16 %v1383, %v1381
        %v1394 = vperm.slane %v1291, 0
        %1396 = vmatpush.bf16.msra.mxu0 %v1392
        %1397 = vmatpush.bf16.msra.mxu0 %v1391
        %1398 = vmatpush.bf16.msra.mxu0 %v1390
        %1399 = vmatpush.bf16.msra.mxu0 %v1389
        %1400 = vmatpush.bf16.msra.mxu0 %v1388
        %1401 = vmatpush.bf16.msra.mxu0 %v1387
        %1402 = vmatpush.bf16.msra.mxu0 %v1386
        %1403 = vmatpush.bf16.msra.mxu0 %v1385
        %1404 = vmatmul.bf16.gmra.mxu0 %v857
        %v1405 = vpop.f32.mrf.mxu0
        %v1406 = vadd.f32 %v1394, %v1405
        %v1407 = vpop.f32.mrf.mxu0
        %v1408 = vadd.f32 %v1394, %v1407
        %1409 = vmatmul.bf16.gmra.mxu0 %v858
        %v1410 = vpop.f32.mrf.mxu0
        %v1411 = vadd.f32 %v1394, %v1410
        %v1412 = vpop.f32.mrf.mxu0
        %v1413 = vadd.f32 %v1394, %v1412
        %1414 = vmatmul.bf16.gmra.mxu0 %v859
        %v1415 = vpop.f32.mrf.mxu0
        %v1416 = vadd.f32 %v1394, %v1415
        %v1417 = vpop.f32.mrf.mxu0
        %v1418 = vadd.f32 %v1394, %v1417
        %1419 = vmatmul.bf16.gmra.mxu0 %v860
        %v1420 = vpop.f32.mrf.mxu0
        %v1421 = vadd.f32 %v1394, %v1420
        %v1422 = vpop.f32.mrf.mxu0
        %v1423 = vadd.f32 %v1394, %v1422
        %1424 = vmatmul.bf16.gmra.mxu0 %v861
        %v1425 = vpop.f32.mrf.mxu0
        %v1426 = vadd.f32 %v1394, %v1425
        %v1427 = vpop.f32.mrf.mxu0
        %v1428 = vadd.f32 %v1394, %v1427
        %1429 = vmatmul.bf16.gmra.mxu0 %v862
        %v1430 = vpop.f32.mrf.mxu0
        %v1431 = vadd.f32 %v1394, %v1430
        %v1432 = vpop.f32.mrf.mxu0
        %v1433 = vadd.f32 %v1394, %v1432
        %1434 = vmatmul.bf16.gmra.mxu0 %v863
        %v1435 = vpop.f32.mrf.mxu0
        %v1436 = vadd.f32 %v1394, %v1435
        %v1437 = vpop.f32.mrf.mxu0
        %v1438 = vadd.f32 %v1394, %v1437
        %1439 = vmatmul.bf16.gmra.mxu0 %v864
        %v1440 = vpop.f32.mrf.mxu0
        %v1441 = vadd.f32 %v1394, %v1440
        %v1442 = vpop.f32.mrf.mxu0
        %v1443 = vadd.f32 %v1394, %v1442
        %1444 = vdwg.mxu0
        %v1445 = vmax.f32 %v1406, 0.0
        %v1446 = vmax.f32 %v1408, 0.0
        %v1447 = vmax.f32 %v1411, 0.0
        %v1448 = vmax.f32 %v1413, 0.0
        %v1449 = vmax.f32 %v1416, 0.0
        %v1450 = vmax.f32 %v1418, 0.0
        %v1451 = vmax.f32 %v1421, 0.0
        %v1452 = vmax.f32 %v1423, 0.0
        %v1453 = vmax.f32 %v1426, 0.0
        %v1454 = vmax.f32 %v1428, 0.0
        %v1455 = vmax.f32 %v1431, 0.0
        %v1456 = vmax.f32 %v1433, 0.0
        %v1457 = vmax.f32 %v1436, 0.0
        %v1458 = vmax.f32 %v1438, 0.0
        %v1459 = vmax.f32 %v1441, 0.0
        %v1460 = vmax.f32 %v1443, 0.0
        %v1461 = vld [vmem:[#allocation5] sm:$0xff]
        %1462 = vmatpush.msra.mxu0 %v1460
        %1463 = vmatpush.msra.mxu0 %v1459
        %1464 = vmatpush.msra.mxu0 %v1458
        %1465 = vmatpush.msra.mxu0 %v1457
        %1466 = vmatpush.msra.mxu0 %v1456
        %1467 = vmatpush.msra.mxu0 %v1455
        %1468 = vmatpush.msra.mxu0 %v1454
        %1469 = vmatpush.msra.mxu0 %v1453
        %1470 = vmatpush.msra.mxu0 %v1452
        %1471 = vmatpush.msra.mxu0 %v1451
        %1472 = vmatpush.msra.mxu0 %v1450
        %1473 = vmatpush.msra.mxu0 %v1449
        %1474 = vmatpush.msra.mxu0 %v1448
        %1475 = vmatpush.msra.mxu0 %v1447
        %1476 = vmatpush.msra.mxu0 %v1446
        %1477 = vmatpush.msra.mxu0 %v1445
        %1478 = vmatmul.f32.gmra.mxu0 %v1461
        %v1479 = vpop.f32.mrf.mxu0
        %v1480 = vadd.f32 0.0, %v1479
        %1481 = vdwg.mxu0
        %v1482 = vld [vmem:[%s11] sm:$0xff]
        %v1483 = vld [vmem:[%s11 + $0x8] sm:$0xff]
        %v1484 = vld [vmem:[%s11 + $0x10] sm:$0xff]
        %v1485 = vld [vmem:[%s11 + $0x18] sm:$0xff]
        %v1486 = vld [vmem:[%s12] sm:$0x1]
        %v1488 = vperm.slane %v1486, 0
        %v1491 = vsel %vm963, %v1480, 0
        %1493 = vmatpush.msra.mxu0 0.0
        %1494 = vmatpush.msra.mxu0 0.0
        %1495 = vmatpush.msra.mxu0 0.0
        %1496 = vmatpush.msra.mxu0 0.0
        %1497 = vmatpush.msra.mxu0 0.0
        %1498 = vmatpush.msra.mxu0 0.0
        %1499 = vmatpush.msra.mxu0 0.0
        %1500 = vmatpush.msra.mxu0 0.0
        %1501 = vmatpush.msra.mxu0 0.0
        %1502 = vmatpush.msra.mxu0 0.0
        %1503 = vmatpush.msra.mxu0 0.0
        %1504 = vmatpush.msra.mxu0 0.0
        %1505 = vmatpush.msra.mxu0 %v1485
        %1506 = vmatpush.msra.mxu0 %v1484
        %1507 = vmatpush.msra.mxu0 %v1483
        %1508 = vmatpush.msra.mxu0 %v1482
        %1509 = vmatmul.f32.gmra.mxu0 %v1491
        %v1510 = vpop.f32.mrf.mxu0
        %v1511 = vadd.f32 %v1488, %v1510
        %1512 = vdwg.mxu0
        %v1513 = vmax.f32 %v1511, 0.0
        %v1514 = vld [vmem:[#allocation11] sm:$0xff]
        %v1515 = vld [vmem:[#allocation11 + $0x8] sm:$0xff]
        %v1516 = vld [vmem:[%s14] sm:$0x1]
        %v1518 = vperm.slane %v1516, 0
        %vm1520 = vcmask 130048
        %v1522 = vsel %vm1520, %v1513, 0
        %1524 = vmatpush.msra.mxu0 0.0
        %1525 = vmatpush.msra.mxu0 0.0
        %1526 = vmatpush.msra.mxu0 0.0
        %1527 = vmatpush.msra.mxu0 0.0
        %1528 = vmatpush.msra.mxu0 0.0
        %1529 = vmatpush.msra.mxu0 0.0
        %1530 = vmatpush.msra.mxu0 0.0
        %1531 = vmatpush.msra.mxu0 0.0
        %1532 = vmatpush.msra.mxu0 0.0
        %1533 = vmatpush.msra.mxu0 0.0
        %1534 = vmatpush.msra.mxu0 0.0
        %1535 = vmatpush.msra.mxu0 0.0
        %1536 = vmatpush.msra.mxu0 0.0
        %1537 = vmatpush.msra.mxu0 0.0
        %1538 = vmatpush.msra.mxu0 %v1515
        %1539 = vmatpush.msra.mxu0 %v1514
        %1540 = vmatmul.f32.gmra.mxu0 %v1522
        %v1541 = vpop.f32.mrf.mxu0
        %v1542 = vadd.f32 %v1518, %v1541
        %1543 = vdwg.mxu0
        %1544 = vst [vmem:[%s611] sm:$0xff] %v1542
        %s1545 = sand.u32 %s368, 1
        %s1546 = scalar_lea.sflag [#allocation4], %s1545
        %s1547 = sand.u32 %s368, 1
        %s1548 = smul.addr %s1547, 8
        %s1549 = scalar_lea.vmem [#allocation13], %s1548
        // Predicated region
        $region105: #{tpu_custom_call.1} parent=79 // pred_check
          %p1550 = pneg %p378
        $region106: #{tpu_custom_call.1} parent=79 // pred_check_branch
          %1552 = sbr.rel (%p1550) target = $region108
        $region107: #{tpu_custom_call.1} parent=79 // pred_region
          %1554 = vsyncadd %s1546, 0
          %s1555 = smul.addr %s35, 8
          %s1556 = scalar_lea.hbm %s15, %s1555
          %s1558 = sshll.u32 %s1549, 4
          %s1559 = int_to_ptr.vmem [resolvable:$true] %s1558
          %s1560 = sshll.u32 %s1556, 4
          %s1561 = int_to_ptr.hbm [resolvable:$true] %s1560
          %1563 = dma.vmem_to_hbm [thread:$0]  %s1559, 128, %s1561, %s1546
        $region108: #{tpu_custom_call.1} parent=79 // pred_fallthru
          _
      $region80: #{tpu_custom_call.1} parent=5 // pred_fallthru
        _
      %p1564 = scmp.le.s32.totalorder 2, %s30
      // Predicated region
      $region109: #{tpu_custom_call.1} parent=5 // pred_check
        %p1565 = pneg %p1564
      $region110: #{tpu_custom_call.1} parent=5 // pred_check_branch
        %1567 = sbr.rel (%p1565) target = $region112
      $region111: #{tpu_custom_call.1} parent=5 // pred_region
        %s1568 = ssub.s32 %s30, 2
        // Predicated region
        $region113: #{tpu_custom_call.1} parent=111 // pred_check
          %p1569 = pneg %p384
        $region114: #{tpu_custom_call.1} parent=111 // pred_check_branch
          %1571 = sbr.rel (%p1569) target = $region116
        $region115: #{tpu_custom_call.1} parent=111 // pred_region
          %s1572 = sand.u32 %s369, 1
          %s1573 = scalar_lea.sflag [#allocation4], %s1572
          %s1574 = sand.u32 %s369, 1
          %s1575 = smul.addr %s1574, 8
          %s1576 = scalar_lea.vmem [#allocation13], %s1575
          %1578 = dma.done %s1573, 128
        $region116: #{tpu_custom_call.1} parent=111 // pred_fallthru
          _
      $region112: #{tpu_custom_call.1} parent=5 // pred_fallthru
        _
    $region6: #{tpu_custom_call.1} parent=1 // loop_footer
      %s34 = sadd.s32 1, %s30
    $region7: #{tpu_custom_call.1} parent=1 // loop_footer_branch
      %29 = sbr.rel target = $region3
    $region8: #{tpu_custom_call.1} parent=1 // loop_exit
      _
    %1579 = vsyncpa [#allocation3], 1
    %s1580 = scalar_lea.sflag [#allocation3], 1
    %1581 = vsyncpa %s1580, 1
    %1582 = vsyncpa [#allocation6], 1
    %1583 = vsyncpa [#allocation9], 1
    %1584 = vsyncpa [#allocation12], 1
    %1585 = vsyncpa [#allocation4], 1
    %s1586 = scalar_lea.sflag [#allocation4], 1
    %1587 = vsyncpa %s1586, 1

</llo_original>
